<compile_context>
chip_gen: v6e
topology: v6e:2x2x1
jax: 0.10.0
libtpu: 0.0.40
codegen_flags: <defaults>
</compile_context>

<pallas_src>
import functools
import math

import jax
import jax.numpy as jnp
from jax.experimental import pallas as pl
from jax.experimental.pallas import tpu as pltpu

# Hidden layer widths of PNet.fc
HIDDEN = (896, 512, 256, 128, 64, 32)
LANE = 128


def _round_up(n, m):
    return ((n + m - 1) // m) * m


def _pick_epilogue_dtype():
    """bf16 epilogue on chips with a bf16 VALU (v6e/v7x); f32 otherwise."""
    try:
        kind = jax.devices()[0].device_kind.lower()
    except Exception:
        kind = ""
    if "v6" in kind or "v7" in kind:
        return jnp.bfloat16
    return jnp.float32


def _batch_tiling(B):
    """Batch-tile size (multiple of 16) and padded batch."""
    TB_CAP = 512
    if B > TB_CAP:
        tb = TB_CAP
    elif B > 128:
        # Split into >= 2 tiles so the "parallel" grid axis can use both
        # TensorCores on v7x (and amortizes per-step overhead elsewhere).
        tb = _round_up((B + 1) // 2, 16)
    else:
        tb = _round_up(max(B, 16), 16)
    b_pad = _round_up(B, tb)
    return tb, b_pad


def pnet_kernel(alpha_ref,
                x_ref,
                w0_ref, b0_ref,
                w1_ref, b1_ref,
                w2_ref, b2_ref,
                w3_ref, b3_ref,
                w4_ref, b4_ref,
                w5_ref, b5_ref,
                w6_ref, b6_ref,
                o_ref,
                *, epi_dtype):
    """One batch tile through the whole MLP.

    bf16 operands into the MXU with f32 accumulation; bias + PReLU epilogue
    in `epi_dtype` (bf16 on v6e/v7x, f32 on v5e).  Dropout = identity.
    """
    w_refs = (w0_ref, w1_ref, w2_ref, w3_ref, w4_ref, w5_ref)
    b_refs = (b0_ref, b1_ref, b2_ref, b3_ref, b4_ref, b5_ref)

    h = x_ref[...]                                  # already bf16, real K width
    for i in range(6):
        acc = jnp.dot(h, w_refs[i][...],
                      preferred_element_type=jnp.float32)   # MXU, f32 acc
        acc = acc.astype(epi_dtype)                 # single cast (no-op if f32)
        acc = acc + b_refs[i][...]                  # bias in epilogue dtype
        a = alpha_ref[i].astype(epi_dtype)          # scalar slope from SMEM
        # PReLU(x) = max(x, a*x); valid because the slope (0.25) lies in (0,1].
        acc = jnp.maximum(acc, a * acc)
        # Dropout(p=0.5): identity in eval mode.
        h = acc.astype(jnp.bfloat16)                # MXU operand for next layer

    out = jnp.dot(h, w6_ref[...], preferred_element_type=jnp.float32)
    out = out + b6_ref[...]                         # final bias kept in f32
    o_ref[...] = out.astype(o_ref.dtype)


def init_pnet_params(key, input_size, output_size):
    """Deterministic PyTorch-style init: U(-1/sqrt(fan_in), 1/sqrt(fan_in))."""
    dims = (input_size,) + HIDDEN + (output_size,)
    ws, bs = [], []
    for i in range(len(dims) - 1):
        fan_in, fan_out = dims[i], dims[i + 1]
        key, kw, kb = jax.random.split(key, 3)
        bound = 1.0 / math.sqrt(fan_in)
        w = jax.random.uniform(kw, (fan_in, fan_out), jnp.float32, -bound, bound)
        b = jax.random.uniform(kb, (1, fan_out), jnp.float32, -bound, bound)
        ws.append(w)
        bs.append(b)
    # 6 PReLU slopes (PyTorch default num_parameters=1, value 0.25); padded to 8.
    alphas = jnp.full((8,), 0.25, dtype=jnp.float32)
    return ws, bs, alphas


def pad_params(ws, bs, epi_dtype):
    """bf16 weights; fan_out padded to 128 lanes, fan_in padded to 128 except
    layer 0 (kept at the real input width).  Padded rows/cols are zero so the
    math is unchanged.  Biases stored in the epilogue dtype (last layer f32)."""
    ws_pad, bs_pad = [], []
    n = len(ws)
    for i, (w, b) in enumerate(zip(ws, bs)):
        fi, fo = w.shape
        fip = fi if i == 0 else _round_up(fi, LANE)
        fop = _round_up(fo, LANE)
        wp = jnp.zeros((fip, fop), jnp.bfloat16).at[:fi, :fo].set(
            w.astype(jnp.bfloat16))
        bdt = jnp.float32 if i == n - 1 else epi_dtype
        bp = jnp.zeros((1, fop), bdt).at[:, :fo].set(b.astype(bdt))
        ws_pad.append(wp)
        bs_pad.append(bp)
    return ws_pad, bs_pad


def pnet_forward(x, ws_pad, bs_pad, alphas, output_size, *, epi_dtype):
    """x: (B, input_size) f32.  Returns (B, output_size) f32."""
    B, d_in = x.shape
    assert ws_pad[0].shape[0] == d_in, "layer-0 K must equal the input width"
    d_out_pad = ws_pad[-1].shape[1]

    tb, b_pad = _batch_tiling(B)
    num_tiles = b_pad // tb

    # Pre-cast x to bf16 (first dot would do it anyway); pad rows only.
    # NOTE: rows >= B of the raw kernel output are garbage and are sliced off.
    x_pad = jnp.zeros((b_pad, d_in), jnp.bfloat16).at[:B, :].set(
        x.astype(jnp.bfloat16))

    smem = pl.BlockSpec(memory_space=pltpu.MemorySpace.SMEM)
    in_specs = [smem,                                            # PReLU slopes
                pl.BlockSpec((tb, d_in), lambda i: (i, 0))]      # x tile
    operands = [alphas, x_pad]
    for w, b in zip(ws_pad, bs_pad):
        # Constant index_map -> DMA'd once, stays VMEM-resident across tiles.
        in_specs.append(pl.BlockSpec(w.shape, lambda i: (0, 0)))
        in_specs.append(pl.BlockSpec(b.shape, lambda i: (0, 0)))
        operands.extend([w, b])

    flops = sum(2 * b_pad * w.shape[0] * w.shape[1] for w in ws_pad)
    bytes_accessed = (x_pad.size * 2 + b_pad * d_out_pad * 4
                      + sum(w.size * 2 for w in ws_pad)
                      + sum(b.size * b.dtype.itemsize for b in bs_pad))

    out = pl.pallas_call(
        functools.partial(pnet_kernel, epi_dtype=epi_dtype),
        out_shape=jax.ShapeDtypeStruct((b_pad, d_out_pad), jnp.float32),
        grid=(num_tiles,),
        in_specs=in_specs,
        out_specs=pl.BlockSpec((tb, d_out_pad), lambda i: (i, 0)),
        compiler_params=pltpu.CompilerParams(
            dimension_semantics=("parallel",),
            vmem_limit_bytes=32 * 1024 * 1024),
        cost_estimate=pl.CostEstimate(
            flops=int(flops), transcendentals=0,
            bytes_accessed=int(bytes_accessed)),
    )(*operands)

    return out[:B, :output_size]


def pnet_reference(x, ws, bs, alphas, epi_dtype):
    """Pure-JAX reference mirroring the kernel numerics (bf16 dots, f32 acc,
    epilogue in epi_dtype, max-based PReLU)."""
    h = x.astype(jnp.bfloat16)
    for i in range(6):
        acc = jnp.dot(h, ws[i].astype(jnp.bfloat16),
                      preferred_element_type=jnp.float32)
        acc = acc.astype(epi_dtype) + bs[i].astype(epi_dtype)
        a = alphas[i].astype(epi_dtype)
        acc = jnp.maximum(acc, a * acc)
        h = acc.astype(jnp.bfloat16)
    out = jnp.dot(h, ws[6].astype(jnp.bfloat16),
                  preferred_element_type=jnp.float32)
    return out + bs[6].astype(jnp.float32)


if __name__ == "__main__":
    input_size = 32
    output_size = 16
    batch = 8

    key = jax.random.PRNGKey(0)
    key, kx = jax.random.split(key)
    x = jax.random.normal(kx, (batch, input_size), dtype=jnp.float32)

    ws, bs, alphas = init_pnet_params(key, input_size, output_size)

    epi_dtype = _pick_epilogue_dtype()
    ws_pad, bs_pad = pad_params(ws, bs, epi_dtype)

    out = pnet_forward(x, ws_pad, bs_pad, alphas, output_size,
                       epi_dtype=epi_dtype)
    out = jax.block_until_ready(out)

    ref = pnet_reference(x, ws, bs, alphas, epi_dtype)
    assert out.shape == (batch, output_size)
    # Precision contract: kernel matches the bf16-matmul reference (not an
    # exact f32 PyTorch forward); tolerance covers MXU accumulation-order
    # differences only.
    assert jnp.allclose(out, ref, atol=1e-2, rtol=1e-2), "mismatch vs reference"

    # TODO(synk): training-mode Dropout would need in-kernel pltpu.prng_* masking.
    print("KERNEL_OK")
</pallas_src>

<mosaic_0001>
module attributes {stable_mosaic.version = 11 : i64} {
  func.func @pnet_kernel(%arg0: i32, %arg1: memref<8xf32, #tpu.memory_space<smem>>, %arg2: memref<16x32xbf16, #tpu.memory_space<vmem>>, %arg3: memref<32x896xbf16, #tpu.memory_space<vmem>>, %arg4: memref<1x896xf32, #tpu.memory_space<vmem>>, %arg5: memref<896x512xbf16, #tpu.memory_space<vmem>>, %arg6: memref<1x512xf32, #tpu.memory_space<vmem>>, %arg7: memref<512x256xbf16, #tpu.memory_space<vmem>>, %arg8: memref<1x256xf32, #tpu.memory_space<vmem>>, %arg9: memref<256x128xbf16, #tpu.memory_space<vmem>>, %arg10: memref<1x128xf32, #tpu.memory_space<vmem>>, %arg11: memref<128x128xbf16, #tpu.memory_space<vmem>>, %arg12: memref<1x128xf32, #tpu.memory_space<vmem>>, %arg13: memref<128x128xbf16, #tpu.memory_space<vmem>>, %arg14: memref<1x128xf32, #tpu.memory_space<vmem>>, %arg15: memref<128x128xbf16, #tpu.memory_space<vmem>>, %arg16: memref<1x128xf32, #tpu.memory_space<vmem>>, %arg17: memref<16x128xf32, #tpu.memory_space<vmem>>) attributes {dimension_semantics = [#tpu.dimension_semantics<parallel>], iteration_bounds = array<i64: 1>, scalar_prefetch = 0 : i64, scratch_operands = 0 : i64, tpu.core_type = #tpu.core_type<tc>, window_params = [{transform_indices = @transform_0, window_bounds = array<i64: 8>}, {transform_indices = @transform_1, window_bounds = array<i64: 16, 32>}, {pipeline_mode = #tpu.pipeline_mode<synchronous>, transform_indices = @transform_2, window_bounds = array<i64: 32, 896>}, {pipeline_mode = #tpu.pipeline_mode<synchronous>, transform_indices = @transform_3, window_bounds = array<i64: 1, 896>}, {pipeline_mode = #tpu.pipeline_mode<synchronous>, transform_indices = @transform_4, window_bounds = array<i64: 896, 512>}, {pipeline_mode = #tpu.pipeline_mode<synchronous>, transform_indices = @transform_5, window_bounds = array<i64: 1, 512>}, {pipeline_mode = #tpu.pipeline_mode<synchronous>, transform_indices = @transform_6, window_bounds = array<i64: 512, 256>}, {pipeline_mode = #tpu.pipeline_mode<synchronous>, transform_indices = @transform_7, window_bounds = array<i64: 1, 256>}, {pipeline_mode = #tpu.pipeline_mode<synchronous>, transform_indices = @transform_8, window_bounds = array<i64: 256, 128>}, {pipeline_mode = #tpu.pipeline_mode<synchronous>, transform_indices = @transform_9, window_bounds = array<i64: 1, 128>}, {pipeline_mode = #tpu.pipeline_mode<synchronous>, transform_indices = @transform_10, window_bounds = array<i64: 128, 128>}, {pipeline_mode = #tpu.pipeline_mode<synchronous>, transform_indices = @transform_11, window_bounds = array<i64: 1, 128>}, {pipeline_mode = #tpu.pipeline_mode<synchronous>, transform_indices = @transform_12, window_bounds = array<i64: 128, 128>}, {pipeline_mode = #tpu.pipeline_mode<synchronous>, transform_indices = @transform_13, window_bounds = array<i64: 1, 128>}, {pipeline_mode = #tpu.pipeline_mode<synchronous>, transform_indices = @transform_14, window_bounds = array<i64: 128, 128>}, {pipeline_mode = #tpu.pipeline_mode<synchronous>, transform_indices = @transform_15, window_bounds = array<i64: 1, 128>}, {transform_indices = @transform_16, window_bounds = array<i64: 16, 128>}]} {
    %c0 = arith.constant 0 : index
    %c0_0 = arith.constant 0 : index
    %0 = vector.load %arg2[%c0, %c0_0] : memref<16x32xbf16, #tpu.memory_space<vmem>>, vector<16x32xbf16>
    %c0_1 = arith.constant 0 : index
    %c0_2 = arith.constant 0 : index
    %1 = vector.load %arg3[%c0_1, %c0_2] : memref<32x896xbf16, #tpu.memory_space<vmem>>, vector<32x896xbf16>
    %cst = arith.constant dense<0.000000e+00> : vector<16x896xf32>
    %2 = tpu.matmul %0, %1, %cst {dimension_numbers = #tpu.dot_dimension_numbers<[1], [0], [0], [1], [0, 0, 1, 1], [], []>} : vector<16x32xbf16>, vector<32x896xbf16>, vector<16x896xf32> -> vector<16x896xf32>
    %c0_3 = arith.constant 0 : index
    %c0_4 = arith.constant 0 : index
    %3 = vector.load %arg4[%c0_3, %c0_4] : memref<1x896xf32, #tpu.memory_space<vmem>>, vector<1x896xf32>
    %4 = vector.broadcast %3 : vector<1x896xf32> to vector<16x896xf32>
    %5 = arith.addf %2, %4 : vector<16x896xf32>
    %c0_5 = arith.constant 0 : index
    %6 = memref.load %arg1[%c0_5] : memref<8xf32, #tpu.memory_space<smem>>
    %7 = vector.broadcast %6 : f32 to vector<16x896xf32>
    %8 = arith.mulf %7, %5 : vector<16x896xf32>
    %9 = arith.maximumf %5, %8 : vector<16x896xf32>
    %10 = arith.truncf %9 : vector<16x896xf32> to vector<16x896xbf16>
    %c0_6 = arith.constant 0 : index
    %c0_7 = arith.constant 0 : index
    %11 = vector.load %arg5[%c0_6, %c0_7] : memref<896x512xbf16, #tpu.memory_space<vmem>>, vector<896x512xbf16>
    %cst_8 = arith.constant dense<0.000000e+00> : vector<16x512xf32>
    %12 = tpu.matmul %10, %11, %cst_8 {dimension_numbers = #tpu.dot_dimension_numbers<[1], [0], [0], [1], [0, 0, 1, 1], [], []>} : vector<16x896xbf16>, vector<896x512xbf16>, vector<16x512xf32> -> vector<16x512xf32>
    %c0_9 = arith.constant 0 : index
    %c0_10 = arith.constant 0 : index
    %13 = vector.load %arg6[%c0_9, %c0_10] : memref<1x512xf32, #tpu.memory_space<vmem>>, vector<1x512xf32>
    %14 = vector.broadcast %13 : vector<1x512xf32> to vector<16x512xf32>
    %15 = arith.addf %12, %14 : vector<16x512xf32>
    %c1 = arith.constant 1 : index
    %16 = memref.load %arg1[%c1] : memref<8xf32, #tpu.memory_space<smem>>
    %17 = vector.broadcast %16 : f32 to vector<16x512xf32>
    %18 = arith.mulf %17, %15 : vector<16x512xf32>
    %19 = arith.maximumf %15, %18 : vector<16x512xf32>
    %20 = arith.truncf %19 : vector<16x512xf32> to vector<16x512xbf16>
    %c0_11 = arith.constant 0 : index
    %c0_12 = arith.constant 0 : index
    %21 = vector.load %arg7[%c0_11, %c0_12] : memref<512x256xbf16, #tpu.memory_space<vmem>>, vector<512x256xbf16>
    %cst_13 = arith.constant dense<0.000000e+00> : vector<16x256xf32>
    %22 = tpu.matmul %20, %21, %cst_13 {dimension_numbers = #tpu.dot_dimension_numbers<[1], [0], [0], [1], [0, 0, 1, 1], [], []>} : vector<16x512xbf16>, vector<512x256xbf16>, vector<16x256xf32> -> vector<16x256xf32>
    %c0_14 = arith.constant 0 : index
    %c0_15 = arith.constant 0 : index
    %23 = vector.load %arg8[%c0_14, %c0_15] : memref<1x256xf32, #tpu.memory_space<vmem>>, vector<1x256xf32>
    %24 = vector.broadcast %23 : vector<1x256xf32> to vector<16x256xf32>
    %25 = arith.addf %22, %24 : vector<16x256xf32>
    %c2 = arith.constant 2 : index
    %26 = memref.load %arg1[%c2] : memref<8xf32, #tpu.memory_space<smem>>
    %27 = vector.broadcast %26 : f32 to vector<16x256xf32>
    %28 = arith.mulf %27, %25 : vector<16x256xf32>
    %29 = arith.maximumf %25, %28 : vector<16x256xf32>
    %30 = arith.truncf %29 : vector<16x256xf32> to vector<16x256xbf16>
    %c0_16 = arith.constant 0 : index
    %c0_17 = arith.constant 0 : index
    %31 = vector.load %arg9[%c0_16, %c0_17] : memref<256x128xbf16, #tpu.memory_space<vmem>>, vector<256x128xbf16>
    %cst_18 = arith.constant dense<0.000000e+00> : vector<16x128xf32>
    %32 = tpu.matmul %30, %31, %cst_18 {dimension_numbers = #tpu.dot_dimension_numbers<[1], [0], [0], [1], [0, 0, 1, 1], [], []>} : vector<16x256xbf16>, vector<256x128xbf16>, vector<16x128xf32> -> vector<16x128xf32>
    %c0_19 = arith.constant 0 : index
    %c0_20 = arith.constant 0 : index
    %33 = vector.load %arg10[%c0_19, %c0_20] : memref<1x128xf32, #tpu.memory_space<vmem>>, vector<1x128xf32>
    %34 = vector.broadcast %33 : vector<1x128xf32> to vector<16x128xf32>
    %35 = arith.addf %32, %34 : vector<16x128xf32>
    %c3 = arith.constant 3 : index
    %36 = memref.load %arg1[%c3] : memref<8xf32, #tpu.memory_space<smem>>
    %37 = vector.broadcast %36 : f32 to vector<16x128xf32>
    %38 = arith.mulf %37, %35 : vector<16x128xf32>
    %39 = arith.maximumf %35, %38 : vector<16x128xf32>
    %40 = arith.truncf %39 : vector<16x128xf32> to vector<16x128xbf16>
    %c0_21 = arith.constant 0 : index
    %c0_22 = arith.constant 0 : index
    %41 = vector.load %arg11[%c0_21, %c0_22] : memref<128x128xbf16, #tpu.memory_space<vmem>>, vector<128x128xbf16>
    %cst_23 = arith.constant dense<0.000000e+00> : vector<16x128xf32>
    %42 = tpu.matmul %40, %41, %cst_23 {dimension_numbers = #tpu.dot_dimension_numbers<[1], [0], [0], [1], [0, 0, 1, 1], [], []>} : vector<16x128xbf16>, vector<128x128xbf16>, vector<16x128xf32> -> vector<16x128xf32>
    %c0_24 = arith.constant 0 : index
    %c0_25 = arith.constant 0 : index
    %43 = vector.load %arg12[%c0_24, %c0_25] : memref<1x128xf32, #tpu.memory_space<vmem>>, vector<1x128xf32>
    %44 = vector.broadcast %43 : vector<1x128xf32> to vector<16x128xf32>
    %45 = arith.addf %42, %44 : vector<16x128xf32>
    %c4 = arith.constant 4 : index
    %46 = memref.load %arg1[%c4] : memref<8xf32, #tpu.memory_space<smem>>
    %47 = vector.broadcast %46 : f32 to vector<16x128xf32>
    %48 = arith.mulf %47, %45 : vector<16x128xf32>
    %49 = arith.maximumf %45, %48 : vector<16x128xf32>
    %50 = arith.truncf %49 : vector<16x128xf32> to vector<16x128xbf16>
    %c0_26 = arith.constant 0 : index
    %c0_27 = arith.constant 0 : index
    %51 = vector.load %arg13[%c0_26, %c0_27] : memref<128x128xbf16, #tpu.memory_space<vmem>>, vector<128x128xbf16>
    %cst_28 = arith.constant dense<0.000000e+00> : vector<16x128xf32>
    %52 = tpu.matmul %50, %51, %cst_28 {dimension_numbers = #tpu.dot_dimension_numbers<[1], [0], [0], [1], [0, 0, 1, 1], [], []>} : vector<16x128xbf16>, vector<128x128xbf16>, vector<16x128xf32> -> vector<16x128xf32>
    %c0_29 = arith.constant 0 : index
    %c0_30 = arith.constant 0 : index
    %53 = vector.load %arg14[%c0_29, %c0_30] : memref<1x128xf32, #tpu.memory_space<vmem>>, vector<1x128xf32>
    %54 = vector.broadcast %53 : vector<1x128xf32> to vector<16x128xf32>
    %55 = arith.addf %52, %54 : vector<16x128xf32>
    %c5 = arith.constant 5 : index
    %56 = memref.load %arg1[%c5] : memref<8xf32, #tpu.memory_space<smem>>
    %57 = vector.broadcast %56 : f32 to vector<16x128xf32>
    %58 = arith.mulf %57, %55 : vector<16x128xf32>
    %59 = arith.maximumf %55, %58 : vector<16x128xf32>
    %60 = arith.truncf %59 : vector<16x128xf32> to vector<16x128xbf16>
    %c0_31 = arith.constant 0 : index
    %c0_32 = arith.constant 0 : index
    %61 = vector.load %arg15[%c0_31, %c0_32] : memref<128x128xbf16, #tpu.memory_space<vmem>>, vector<128x128xbf16>
    %cst_33 = arith.constant dense<0.000000e+00> : vector<16x128xf32>
    %62 = tpu.matmul %60, %61, %cst_33 {dimension_numbers = #tpu.dot_dimension_numbers<[1], [0], [0], [1], [0, 0, 1, 1], [], []>} : vector<16x128xbf16>, vector<128x128xbf16>, vector<16x128xf32> -> vector<16x128xf32>
    %c0_34 = arith.constant 0 : index
    %c0_35 = arith.constant 0 : index
    %63 = vector.load %arg16[%c0_34, %c0_35] : memref<1x128xf32, #tpu.memory_space<vmem>>, vector<1x128xf32>
    %64 = vector.broadcast %63 : vector<1x128xf32> to vector<16x128xf32>
    %65 = arith.addf %62, %64 : vector<16x128xf32>
    %c0_36 = arith.constant 0 : index
    %c0_37 = arith.constant 0 : index
    %66 = vector.load %arg17[%c0_36, %c0_37] : memref<16x128xf32, #tpu.memory_space<vmem>>, vector<16x128xf32>
    tpu.vector_store %arg17[%c0_36, %c0_37], %65 {strides = array<i32>} : memref<16x128xf32, #tpu.memory_space<vmem>>, vector<16x128xf32>,
    return
  }
  func.func @transform_0(%arg0: i32) -> i32 {
    %c0_i32 = arith.constant 0 : i32
    %c0_i32_0 = arith.constant 0 : i32
    return %c0_i32 : i32
  }
  func.func @transform_1(%arg0: i32) -> (i32, i32) {
    %c0_i32 = arith.constant 0 : i32
    %c0_i32_0 = arith.constant 0 : i32
    return %arg0, %c0_i32 : i32, i32
  }
  func.func @transform_2(%arg0: i32) -> (i32, i32) {
    %c0_i32 = arith.constant 0 : i32
    %c0_i32_0 = arith.constant 0 : i32
    %c0_i32_1 = arith.constant 0 : i32
    return %c0_i32, %c0_i32_0 : i32, i32
  }
  func.func @transform_3(%arg0: i32) -> (i32, i32) {
    %c0_i32 = arith.constant 0 : i32
    %c0_i32_0 = arith.constant 0 : i32
    %c0_i32_1 = arith.constant 0 : i32
    return %c0_i32, %c0_i32_0 : i32, i32
  }
  func.func @transform_4(%arg0: i32) -> (i32, i32) {
    %c0_i32 = arith.constant 0 : i32
    %c0_i32_0 = arith.constant 0 : i32
    %c0_i32_1 = arith.constant 0 : i32
    return %c0_i32, %c0_i32_0 : i32, i32
  }
  func.func @transform_5(%arg0: i32) -> (i32, i32) {
    %c0_i32 = arith.constant 0 : i32
    %c0_i32_0 = arith.constant 0 : i32
    %c0_i32_1 = arith.constant 0 : i32
    return %c0_i32, %c0_i32_0 : i32, i32
  }
  func.func @transform_6(%arg0: i32) -> (i32, i32) {
    %c0_i32 = arith.constant 0 : i32
    %c0_i32_0 = arith.constant 0 : i32
    %c0_i32_1 = arith.constant 0 : i32
    return %c0_i32, %c0_i32_0 : i32, i32
  }
  func.func @transform_7(%arg0: i32) -> (i32, i32) {
    %c0_i32 = arith.constant 0 : i32
    %c0_i32_0 = arith.constant 0 : i32
    %c0_i32_1 = arith.constant 0 : i32
    return %c0_i32, %c0_i32_0 : i32, i32
  }
  func.func @transform_8(%arg0: i32) -> (i32, i32) {
    %c0_i32 = arith.constant 0 : i32
    %c0_i32_0 = arith.constant 0 : i32
    %c0_i32_1 = arith.constant 0 : i32
    return %c0_i32, %c0_i32_0 : i32, i32
  }
  func.func @transform_9(%arg0: i32) -> (i32, i32) {
    %c0_i32 = arith.constant 0 : i32
    %c0_i32_0 = arith.constant 0 : i32
    %c0_i32_1 = arith.constant 0 : i32
    return %c0_i32, %c0_i32_0 : i32, i32
  }
  func.func @transform_10(%arg0: i32) -> (i32, i32) {
    %c0_i32 = arith.constant 0 : i32
    %c0_i32_0 = arith.constant 0 : i32
    %c0_i32_1 = arith.constant 0 : i32
    return %c0_i32, %c0_i32_0 : i32, i32
  }
  func.func @transform_11(%arg0: i32) -> (i32, i32) {
    %c0_i32 = arith.constant 0 : i32
    %c0_i32_0 = arith.constant 0 : i32
    %c0_i32_1 = arith.constant 0 : i32
    return %c0_i32, %c0_i32_0 : i32, i32
  }
  func.func @transform_12(%arg0: i32) -> (i32, i32) {
    %c0_i32 = arith.constant 0 : i32
    %c0_i32_0 = arith.constant 0 : i32
    %c0_i32_1 = arith.constant 0 : i32
    return %c0_i32, %c0_i32_0 : i32, i32
  }
  func.func @transform_13(%arg0: i32) -> (i32, i32) {
    %c0_i32 = arith.constant 0 : i32
    %c0_i32_0 = arith.constant 0 : i32
    %c0_i32_1 = arith.constant 0 : i32
    return %c0_i32, %c0_i32_0 : i32, i32
  }
  func.func @transform_14(%arg0: i32) -> (i32, i32) {
    %c0_i32 = arith.constant 0 : i32
    %c0_i32_0 = arith.constant 0 : i32
    %c0_i32_1 = arith.constant 0 : i32
    return %c0_i32, %c0_i32_0 : i32, i32
  }
  func.func @transform_15(%arg0: i32) -> (i32, i32) {
    %c0_i32 = arith.constant 0 : i32
    %c0_i32_0 = arith.constant 0 : i32
    %c0_i32_1 = arith.constant 0 : i32
    return %c0_i32, %c0_i32_0 : i32, i32
  }
  func.func @transform_16(%arg0: i32) -> (i32, i32) {
    %c0_i32 = arith.constant 0 : i32
    %c0_i32_0 = arith.constant 0 : i32
    return %arg0, %c0_i32 : i32, i32
  }
}

</mosaic_0001>

<llo_original>
// kernel: tpu_custom_call.1
$region0: #{tpu_custom_call.1}
  #allocation0 [shape = 'u32[]', space=smem, size = 0x4, offset = 0x4, fixed_abs, tag = 'smem constant byte address 0x4 - core index']
  #allocation1 [shape = 'u32[144,128]{1,0:T(1,128)}', space=vmem, size = 0x12000, scoped, tag = 'internal scratch']
  %s0 = inlined_call_operand.hbm [shape: f32[8], index: 0, kind: input, shape index: {}]
  %s1 = inlined_call_operand.hbm [shape: bf16[16,32], index: 1, kind: input, shape index: {}]
  %s2 = inlined_call_operand.hbm [shape: bf16[32,896], index: 2, kind: input, shape index: {}]
  %s3 = inlined_call_operand.hbm [shape: f32[1,896], index: 3, kind: input, shape index: {}]
  %s4 = inlined_call_operand.hbm [shape: bf16[896,512], index: 4, kind: input, shape index: {}]
  %s5 = inlined_call_operand.vmem [shape: f32[1,512], index: 5, kind: input, shape index: {}]
  %s6 = inlined_call_operand.hbm [shape: bf16[512,256], index: 6, kind: input, shape index: {}]
  %s7 = inlined_call_operand.vmem [shape: f32[1,256], index: 7, kind: input, shape index: {}]
  %s8 = inlined_call_operand.hbm [shape: bf16[256,128], index: 8, kind: input, shape index: {}]
  %s9 = inlined_call_operand.vmem [shape: f32[1,128], index: 9, kind: input, shape index: {}]
  %s10 = inlined_call_operand.hbm [shape: bf16[128,128], index: 10, kind: input, shape index: {}]
  %s11 = inlined_call_operand.vmem [shape: f32[1,128], index: 11, kind: input, shape index: {}]
  %s12 = inlined_call_operand.hbm [shape: bf16[128,128], index: 12, kind: input, shape index: {}]
  %s13 = inlined_call_operand.vmem [shape: f32[1,128], index: 13, kind: input, shape index: {}]
  %s14 = inlined_call_operand.hbm [shape: bf16[128,128], index: 14, kind: input, shape index: {}]
  %s15 = inlined_call_operand.vmem [shape: f32[1,128], index: 15, kind: input, shape index: {}]
  %s16 = inlined_call_operand.hbm [shape: f32[16,128], index: 16, kind: output, shape index: {}]
  %s17 = sld [smem:[#allocation0]]
  $region114: #{tpu_custom_call.1} parent=0
    _
  %s19 = ssub.s32 1, %s17
  %s20 = scalar_select 0, %s19, %s17
  $region1: #{tpu_custom_call.1} parent=0
    #allocation2 [shape = 'u8[512]{0}', space=smem, size = 0x200, scoped, tag = 'input window, operand 0, single buffered']
    #allocation3 [shape = 's32[1]{0}', space=sflag, size = 0x4, scoped, tag = 'scoped memory for tpu_custom_call.1']
    #allocation4 [shape = 's32[1]{0}', space=sflag, size = 0x4, scoped, tag = 'scoped memory for tpu_custom_call.1']
    #allocation5 [shape = 's32[1]{0}', space=sflag, size = 0x4, scoped, tag = 'scoped memory for tpu_custom_call.1']
    #allocation6 [shape = 'u8[4096]{0}', space=vmem, size = 0x1000, scoped, tag = 'input window, operand 1, single buffered']
    #allocation7 [shape = 'u8[57344]{0}', space=vmem, size = 0xe000, scoped, tag = 'input window, operand 2, single buffered']
    #allocation8 [shape = 's32[1]{0}', space=sflag, size = 0x4, scoped, tag = 'scoped memory for tpu_custom_call.1']
    #allocation9 [shape = 'u8[3584]{0}', space=vmem, size = 0x1000, scoped, tag = 'input window, operand 3, single buffered']
    #allocation10 [shape = 'u8[917504]{0}', space=vmem, size = 0xe0000, scoped, tag = 'input window, operand 4, single buffered']
    #allocation11 [shape = 's32[1]{0}', space=sflag, size = 0x4, scoped, tag = 'scoped memory for tpu_custom_call.1']
    #allocation12 [shape = 'u8[262144]{0}', space=vmem, size = 0x40000, scoped, tag = 'input window, operand 6, single buffered']
    #allocation13 [shape = 'u8[65536]{0}', space=vmem, size = 0x10000, scoped, tag = 'input window, operand 8, single buffered']
    #allocation14 [shape = 's32[1]{0}', space=sflag, size = 0x4, scoped, tag = 'scoped memory for tpu_custom_call.1']
    #allocation15 [shape = 'u8[32768]{0}', space=vmem, size = 0x8000, scoped, tag = 'input window, operand 10, single buffered']
    #allocation16 [shape = 'u8[32768]{0}', space=vmem, size = 0x8000, scoped, tag = 'input window, operand 12, single buffered']
    #allocation17 [shape = 's32[1]{0}', space=sflag, size = 0x4, scoped, tag = 'scoped memory for tpu_custom_call.1']
    #allocation18 [shape = 'u8[32768]{0}', space=vmem, size = 0x8000, scoped, tag = 'input window, operand 14, single buffered']
    #allocation19 [shape = 'u8[8192]{0}', space=vmem, size = 0x2000, scoped, tag = 'output window, operand 0, single buffered']
    %21 = vsyncpa [#allocation5], 0
    %22 = vsyncpa [#allocation3], 0
    %23 = vsyncpa [#allocation8], 0
    %24 = vsyncpa [#allocation11], 0
    %25 = vsyncpa [#allocation14], 0
    %26 = vsyncpa [#allocation17], 0
    %27 = vsyncpa [#allocation4], 0
    // Predicated region
    $region2: #{tpu_custom_call.1} parent=1 // pred_check
      _
    $region3: #{tpu_custom_call.1} parent=1 // pred_check_branch
      %29 = sbr.rel (0) target = $region5
    $region4: #{tpu_custom_call.1} parent=1 // pred_region
      %s31 = ssub.s32 16, 16
      %32 = vsyncadd [#allocation5], %s31
      %35 = dma.hbm_to_smem %s0, 16, [#allocation2], [#allocation5]
    $region5: #{tpu_custom_call.1} parent=1 // pred_fallthru
      _
    // Predicated region
    $region6: #{tpu_custom_call.1} parent=1 // pred_check
      _
    $region7: #{tpu_custom_call.1} parent=1 // pred_check_branch
      %37 = sbr.rel (0) target = $region9
    $region8: #{tpu_custom_call.1} parent=1 // pred_region
      %s39 = ssub.s32 128, 128
      %40 = vsyncadd [#allocation3], %s39
      %s41 = sshll.u32 [#allocation6], 4
      %s42 = int_to_ptr.vmem [resolvable:$true] %s41
      %47 = dma.hbm_to_vmem [thread:$0]  %s1, 128, %s42, [#allocation3], 64, 64, 4
    $region9: #{tpu_custom_call.1} parent=1 // pred_fallthru
      _
    // Predicated region
    $region10: #{tpu_custom_call.1} parent=1 // pred_check
      _
    $region11: #{tpu_custom_call.1} parent=1 // pred_check_branch
      %49 = sbr.rel (0) target = $region13
    $region12: #{tpu_custom_call.1} parent=1 // pred_region
      %s51 = ssub.s32 1792, 1792
      %52 = vsyncadd [#allocation8], %s51
      %s53 = sshll.u32 [#allocation7], 4
      %s54 = int_to_ptr.vmem [resolvable:$true] %s53
      %59 = dma.hbm_to_vmem [thread:$0]  %s2, 1792, %s54, [#allocation8], 448, 448, 28
    $region13: #{tpu_custom_call.1} parent=1 // pred_fallthru
      _
    // Predicated region
    $region14: #{tpu_custom_call.1} parent=1 // pred_check
      _
    $region15: #{tpu_custom_call.1} parent=1 // pred_check_branch
      %61 = sbr.rel (0) target = $region17
    $region16: #{tpu_custom_call.1} parent=1 // pred_region
      %s63 = ssub.s32 112, 112
      %64 = vsyncadd [#allocation8], %s63
      %s66 = sshll.u32 [#allocation9], 4
      %s67 = int_to_ptr.vmem [resolvable:$true] %s66
      %69 = dma.hbm_to_vmem [thread:$0]  %s3, 112, %s67, [#allocation8]
    $region17: #{tpu_custom_call.1} parent=1 // pred_fallthru
      _
    // Predicated region
    $region18: #{tpu_custom_call.1} parent=1 // pred_check
      _
    $region19: #{tpu_custom_call.1} parent=1 // pred_check_branch
      %71 = sbr.rel (0) target = $region21
    $region20: #{tpu_custom_call.1} parent=1 // pred_region
      %s73 = ssub.s32 28672, 28672
      %74 = vsyncadd [#allocation11], %s73
      %s75 = sshll.u32 [#allocation10], 4
      %s76 = int_to_ptr.vmem [resolvable:$true] %s75
      %81 = dma.hbm_to_vmem [thread:$0]  %s4, 28672, %s76, [#allocation11], 256, 256, 16
    $region21: #{tpu_custom_call.1} parent=1 // pred_fallthru
      _
    // Predicated region
    $region22: #{tpu_custom_call.1} parent=1 // pred_check
      _
    $region23: #{tpu_custom_call.1} parent=1 // pred_check_branch
      %83 = sbr.rel (0) target = $region25
    $region24: #{tpu_custom_call.1} parent=1 // pred_region
      _
    $region25: #{tpu_custom_call.1} parent=1 // pred_fallthru
      _
    // Predicated region
    $region26: #{tpu_custom_call.1} parent=1 // pred_check
      _
    $region27: #{tpu_custom_call.1} parent=1 // pred_check_branch
      %85 = sbr.rel (0) target = $region29
    $region28: #{tpu_custom_call.1} parent=1 // pred_region
      %s87 = ssub.s32 8192, 8192
      %88 = vsyncadd [#allocation11], %s87
      %s89 = sshll.u32 [#allocation12], 4
      %s90 = int_to_ptr.vmem [resolvable:$true] %s89
      %95 = dma.hbm_to_vmem [thread:$0]  %s6, 8192, %s90, [#allocation11], 128, 128, 8
    $region29: #{tpu_custom_call.1} parent=1 // pred_fallthru
      _
    // Predicated region
    $region30: #{tpu_custom_call.1} parent=1 // pred_check
      _
    $region31: #{tpu_custom_call.1} parent=1 // pred_check_branch
      %97 = sbr.rel (0) target = $region33
    $region32: #{tpu_custom_call.1} parent=1 // pred_region
      _
    $region33: #{tpu_custom_call.1} parent=1 // pred_fallthru
      _
    // Predicated region
    $region34: #{tpu_custom_call.1} parent=1 // pred_check
      _
    $region35: #{tpu_custom_call.1} parent=1 // pred_check_branch
      %99 = sbr.rel (0) target = $region37
    $region36: #{tpu_custom_call.1} parent=1 // pred_region
      %s101 = ssub.s32 2048, 2048
      %102 = vsyncadd [#allocation14], %s101
      %s103 = sshll.u32 [#allocation13], 4
      %s104 = int_to_ptr.vmem [resolvable:$true] %s103
      %109 = dma.hbm_to_vmem [thread:$0]  %s8, 2048, %s104, [#allocation14], 64, 64, 4
    $region37: #{tpu_custom_call.1} parent=1 // pred_fallthru
      _
    // Predicated region
    $region38: #{tpu_custom_call.1} parent=1 // pred_check
      _
    $region39: #{tpu_custom_call.1} parent=1 // pred_check_branch
      %111 = sbr.rel (0) target = $region41
    $region40: #{tpu_custom_call.1} parent=1 // pred_region
      _
    $region41: #{tpu_custom_call.1} parent=1 // pred_fallthru
      _
    // Predicated region
    $region42: #{tpu_custom_call.1} parent=1 // pred_check
      _
    $region43: #{tpu_custom_call.1} parent=1 // pred_check_branch
      %113 = sbr.rel (0) target = $region45
    $region44: #{tpu_custom_call.1} parent=1 // pred_region
      %s115 = ssub.s32 1024, 1024
      %116 = vsyncadd [#allocation14], %s115
      %s117 = sshll.u32 [#allocation15], 4
      %s118 = int_to_ptr.vmem [resolvable:$true] %s117
      %123 = dma.hbm_to_vmem [thread:$0]  %s10, 1024, %s118, [#allocation14], 64, 64, 4
    $region45: #{tpu_custom_call.1} parent=1 // pred_fallthru
      _
    // Predicated region
    $region46: #{tpu_custom_call.1} parent=1 // pred_check
      _
    $region47: #{tpu_custom_call.1} parent=1 // pred_check_branch
      %125 = sbr.rel (0) target = $region49
    $region48: #{tpu_custom_call.1} parent=1 // pred_region
      _
    $region49: #{tpu_custom_call.1} parent=1 // pred_fallthru
      _
    // Predicated region
    $region50: #{tpu_custom_call.1} parent=1 // pred_check
      _
    $region51: #{tpu_custom_call.1} parent=1 // pred_check_branch
      %127 = sbr.rel (0) target = $region53
    $region52: #{tpu_custom_call.1} parent=1 // pred_region
      %s129 = ssub.s32 1024, 1024
      %130 = vsyncadd [#allocation17], %s129
      %s131 = sshll.u32 [#allocation16], 4
      %s132 = int_to_ptr.vmem [resolvable:$true] %s131
      %137 = dma.hbm_to_vmem [thread:$0]  %s12, 1024, %s132, [#allocation17], 64, 64, 4
    $region53: #{tpu_custom_call.1} parent=1 // pred_fallthru
      _
    // Predicated region
    $region54: #{tpu_custom_call.1} parent=1 // pred_check
      _
    $region55: #{tpu_custom_call.1} parent=1 // pred_check_branch
      %139 = sbr.rel (0) target = $region57
    $region56: #{tpu_custom_call.1} parent=1 // pred_region
      _
    $region57: #{tpu_custom_call.1} parent=1 // pred_fallthru
      _
    // Predicated region
    $region58: #{tpu_custom_call.1} parent=1 // pred_check
      _
    $region59: #{tpu_custom_call.1} parent=1 // pred_check_branch
      %141 = sbr.rel (0) target = $region61
    $region60: #{tpu_custom_call.1} parent=1 // pred_region
      %s143 = ssub.s32 1024, 1024
      %144 = vsyncadd [#allocation17], %s143
      %s145 = sshll.u32 [#allocation18], 4
      %s146 = int_to_ptr.vmem [resolvable:$true] %s145
      %151 = dma.hbm_to_vmem [thread:$0]  %s14, 1024, %s146, [#allocation17], 64, 64, 4
    $region61: #{tpu_custom_call.1} parent=1 // pred_fallthru
      _
    // Predicated region
    $region62: #{tpu_custom_call.1} parent=1 // pred_check
      _
    $region63: #{tpu_custom_call.1} parent=1 // pred_check_branch
      %153 = sbr.rel (0) target = $region65
    $region64: #{tpu_custom_call.1} parent=1 // pred_region
      _
    $region65: #{tpu_custom_call.1} parent=1 // pred_fallthru
      _
    // Predicated region
    $region66: #{tpu_custom_call.1} parent=1 // pred_check
      _
    $region67: #{tpu_custom_call.1} parent=1 // pred_check_branch
      %155 = sbr.rel (0) target = $region69
    $region68: #{tpu_custom_call.1} parent=1 // pred_region
      %156 = dma.done [#allocation5], 16
    $region69: #{tpu_custom_call.1} parent=1 // pred_fallthru
      _
    // Predicated region
    $region70: #{tpu_custom_call.1} parent=1 // pred_check
      _
    $region71: #{tpu_custom_call.1} parent=1 // pred_check_branch
      %158 = sbr.rel (0) target = $region73
    $region72: #{tpu_custom_call.1} parent=1 // pred_region
      %159 = dma.done [#allocation3], 128
    $region73: #{tpu_custom_call.1} parent=1 // pred_fallthru
      _
    // Predicated region
    $region74: #{tpu_custom_call.1} parent=1 // pred_check
      _
    $region75: #{tpu_custom_call.1} parent=1 // pred_check_branch
      %161 = sbr.rel (0) target = $region77
    $region76: #{tpu_custom_call.1} parent=1 // pred_region
      %162 = dma.done [#allocation8], 1792
    $region77: #{tpu_custom_call.1} parent=1 // pred_fallthru
      _
    // Predicated region
    $region78: #{tpu_custom_call.1} parent=1 // pred_check
      _
    $region79: #{tpu_custom_call.1} parent=1 // pred_check_branch
      %164 = sbr.rel (0) target = $region81
    $region80: #{tpu_custom_call.1} parent=1 // pred_region
      %165 = dma.done [#allocation8], 112
    $region81: #{tpu_custom_call.1} parent=1 // pred_fallthru
      _
    // Predicated region
    $region82: #{tpu_custom_call.1} parent=1 // pred_check
      _
    $region83: #{tpu_custom_call.1} parent=1 // pred_check_branch
      %167 = sbr.rel (0) target = $region85
    $region84: #{tpu_custom_call.1} parent=1 // pred_region
      %168 = dma.done [#allocation11], 28672
    $region85: #{tpu_custom_call.1} parent=1 // pred_fallthru
      _
    // Predicated region
    $region86: #{tpu_custom_call.1} parent=1 // pred_check
      _
    $region87: #{tpu_custom_call.1} parent=1 // pred_check_branch
      %170 = sbr.rel (0) target = $region89
    $region88: #{tpu_custom_call.1} parent=1 // pred_region
      %171 = dma.done [#allocation11], 8192
    $region89: #{tpu_custom_call.1} parent=1 // pred_fallthru
      _
    // Predicated region
    $region90: #{tpu_custom_call.1} parent=1 // pred_check
      _
    $region91: #{tpu_custom_call.1} parent=1 // pred_check_branch
      %173 = sbr.rel (0) target = $region93
    $region92: #{tpu_custom_call.1} parent=1 // pred_region
      %174 = dma.done [#allocation14], 2048
    $region93: #{tpu_custom_call.1} parent=1 // pred_fallthru
      _
    // Predicated region
    $region94: #{tpu_custom_call.1} parent=1 // pred_check
      _
    $region95: #{tpu_custom_call.1} parent=1 // pred_check_branch
      %176 = sbr.rel (0) target = $region97
    $region96: #{tpu_custom_call.1} parent=1 // pred_region
      %177 = dma.done [#allocation14], 1024
    $region97: #{tpu_custom_call.1} parent=1 // pred_fallthru
      _
    // Predicated region
    $region98: #{tpu_custom_call.1} parent=1 // pred_check
      _
    $region99: #{tpu_custom_call.1} parent=1 // pred_check_branch
      %179 = sbr.rel (0) target = $region101
    $region100: #{tpu_custom_call.1} parent=1 // pred_region
      %180 = dma.done [#allocation17], 1024
    $region101: #{tpu_custom_call.1} parent=1 // pred_fallthru
      _
    // Predicated region
    $region102: #{tpu_custom_call.1} parent=1 // pred_check
      _
    $region103: #{tpu_custom_call.1} parent=1 // pred_check_branch
      %182 = sbr.rel (0) target = $region105
    $region104: #{tpu_custom_call.1} parent=1 // pred_region
      %183 = dma.done [#allocation17], 1024
    $region105: #{tpu_custom_call.1} parent=1 // pred_fallthru
      _
    %184 = sfence
    %v186 = vld [vmem:[#allocation6] sm:$0xf]
    %v187 = vld [vmem:[#allocation6 + $0x4] sm:$0xf]
    %v188 = vld [vmem:[#allocation7] sm:$0xff]
    %v189 = vld [vmem:[#allocation7 + $0x8] sm:$0xff]
    %v190 = vld [vmem:[#allocation7 + $0x10] sm:$0xff]
    %v191 = vld [vmem:[#allocation7 + $0x18] sm:$0xf]
    %v192 = vld [vmem:[#allocation7 + $0x1c] sm:$0xff]
    %v193 = vld [vmem:[#allocation7 + $0x24] sm:$0xff]
    %v194 = vld [vmem:[#allocation7 + $0x2c] sm:$0xff]
    %v195 = vld [vmem:[#allocation7 + $0x34] sm:$0xf]
    %v196 = vld [vmem:[#allocation7 + $0x38] sm:$0xff]
    %v197 = vld [vmem:[#allocation7 + $0x40] sm:$0xff]
    %v198 = vld [vmem:[#allocation7 + $0x48] sm:$0xff]
    %v199 = vld [vmem:[#allocation7 + $0x50] sm:$0xf]
    %v200 = vld [vmem:[#allocation7 + $0x54] sm:$0xff]
    %v201 = vld [vmem:[#allocation7 + $0x5c] sm:$0xff]
    %v202 = vld [vmem:[#allocation7 + $0x64] sm:$0xff]
    %v203 = vld [vmem:[#allocation7 + $0x6c] sm:$0xf]
    %v204 = vld [vmem:[#allocation9] sm:$0xff]
    %v206 = vlaneseq
    %v207 = vshrl.u32 %v206, 7
    %v208 = vsub.s32 0, %v207
    %v209 = vrot.slane %v204, %v208
    %v210 = vlaneseq
    %v211 = vshrl.u32 %v210, 7
    %v212 = vsub.s32 1, %v211
    %v213 = vrot.slane %v204, %v212
    %v214 = vlaneseq
    %v215 = vshrl.u32 %v214, 7
    %v216 = vsub.s32 2, %v215
    %v217 = vrot.slane %v204, %v216
    %v218 = vlaneseq
    %v219 = vshrl.u32 %v218, 7
    %v220 = vsub.s32 3, %v219
    %v221 = vrot.slane %v204, %v220
    %v222 = vlaneseq
    %v223 = vshrl.u32 %v222, 7
    %v224 = vsub.s32 4, %v223
    %v225 = vrot.slane %v204, %v224
    %v226 = vlaneseq
    %v227 = vshrl.u32 %v226, 7
    %v228 = vsub.s32 5, %v227
    %v229 = vrot.slane %v204, %v228
    %v230 = vlaneseq
    %v231 = vshrl.u32 %v230, 7
    %v232 = vsub.s32 6, %v231
    %v233 = vrot.slane %v204, %v232
    %v243 = vunpack.c.l.b16 %v186
    %v244 = vunpack.c.l.b16 %v187
    %v245 = vpack.c.b16 %v244, %v243
    %v262 = vunpack.c.l.b16 %v188
    %v263 = vunpack.c.h.b16 %v188
    %v264 = vunpack.c.l.b16 %v189
    %v265 = vunpack.c.h.b16 %v189
    %v266 = vunpack.c.l.b16 %v190
    %v267 = vunpack.c.h.b16 %v190
    %v268 = vunpack.c.l.b16 %v191
    %v269 = vunpack.c.l.b16 %v192
    %v270 = vunpack.c.h.b16 %v192
    %v271 = vunpack.c.l.b16 %v193
    %v272 = vunpack.c.h.b16 %v193
    %v273 = vunpack.c.l.b16 %v194
    %v274 = vunpack.c.h.b16 %v194
    %v275 = vunpack.c.l.b16 %v195
    %v276 = vunpack.c.l.b16 %v196
    %v277 = vunpack.c.h.b16 %v196
    %v278 = vunpack.c.l.b16 %v197
    %v279 = vunpack.c.h.b16 %v197
    %v280 = vunpack.c.l.b16 %v198
    %v281 = vunpack.c.h.b16 %v198
    %v282 = vunpack.c.l.b16 %v199
    %v283 = vunpack.c.l.b16 %v200
    %v284 = vunpack.c.h.b16 %v200
    %v285 = vunpack.c.l.b16 %v201
    %v286 = vunpack.c.h.b16 %v201
    %v287 = vunpack.c.l.b16 %v202
    %v288 = vunpack.c.h.b16 %v202
    %v289 = vunpack.c.l.b16 %v203
    %v290 = vpack.c.b16 %v269, %v262
    %v291 = vpack.c.b16 %v270, %v263
    %v292 = vpack.c.b16 %v271, %v264
    %v293 = vpack.c.b16 %v272, %v265
    %v294 = vpack.c.b16 %v273, %v266
    %v295 = vpack.c.b16 %v274, %v267
    %v296 = vpack.c.b16 %v275, %v268
    %v297 = vpack.c.b16 %v283, %v276
    %v298 = vpack.c.b16 %v284, %v277
    %v299 = vpack.c.b16 %v285, %v278
    %v300 = vpack.c.b16 %v286, %v279
    %v301 = vpack.c.b16 %v287, %v280
    %v302 = vpack.c.b16 %v288, %v281
    %v303 = vpack.c.b16 %v289, %v282
    %vm318 = vcmask 261120
    %v320 = vsel %vm318, %v245, 0
    %322 = vmatprep.subr.bf16.mxu0 0
    %323 = vmatpush1.bf16.msra.mxu0 0
    %324 = vmatprep.subr.bf16.mxu0 0
    %325 = vmatpush1.bf16.msra.mxu0 0
    %326 = vmatprep.subr.bf16.mxu0 0
    %327 = vmatpush1.bf16.msra.mxu0 0
    %328 = vmatprep.subr.bf16.mxu0 0
    %329 = vmatpush1.bf16.msra.mxu0 0
    %330 = vmatprep.subr.bf16.mxu0 0
    %331 = vmatpush1.bf16.msra.mxu0 0
    %332 = vmatprep.subr.bf16.mxu0 0
    %333 = vmatpush1.bf16.msra.mxu0 0
    %334 = vmatprep.subr.bf16.mxu0 %v298
    %335 = vmatpush1.bf16.msra.mxu0 %v297
    %336 = vmatprep.subr.bf16.mxu0 %v291
    %337 = vmatpush1.bf16.msra.mxu0 %v290
    %338 = vmatprep.subr.bf16.mxu0 0
    %339 = vmatpush2.bf16.msra.mxu0 0
    %340 = vmatprep.subr.bf16.mxu0 0
    %341 = vmatpush2.bf16.msra.mxu0 0
    %342 = vmatprep.subr.bf16.mxu0 0
    %343 = vmatpush2.bf16.msra.mxu0 0
    %344 = vmatprep.subr.bf16.mxu0 0
    %345 = vmatpush2.bf16.msra.mxu0 0
    %346 = vmatprep.subr.bf16.mxu0 0
    %347 = vmatpush2.bf16.msra.mxu0 0
    %348 = vmatprep.subr.bf16.mxu0 0
    %349 = vmatpush2.bf16.msra.mxu0 0
    %350 = vmatprep.subr.bf16.mxu0 0
    %351 = vmatpush2.bf16.msra.mxu0 0
    %352 = vmatprep.subr.bf16.mxu0 0
    %353 = vmatpush2.bf16.msra.mxu0 0
    %354 = vmatprep.mubr.bf16.mxu0 0
    %355 = vmatmul.mubr.bf16.gmra.mxu0 %v320
    %v356 = vpop.f32.mrf.mxu0
    %v357 = vadd.f32 %v209, %v356
    %v358 = vpop.f32.mrf.mxu0
    %v359 = vadd.f32 %v213, %v358
    %v360 = vpop.f32.mrf.mxu0
    %v361 = vadd.f32 %v209, %v360
    %v362 = vpop.f32.mrf.mxu0
    %v363 = vadd.f32 %v213, %v362
    %364 = vdwg.mxu0
    %365 = vmatprep.subr.bf16.mxu0 0
    %366 = vmatpush1.bf16.msra.mxu0 0
    %367 = vmatprep.subr.bf16.mxu0 0
    %368 = vmatpush1.bf16.msra.mxu0 0
    %369 = vmatprep.subr.bf16.mxu0 0
    %370 = vmatpush1.bf16.msra.mxu0 0
    %371 = vmatprep.subr.bf16.mxu0 0
    %372 = vmatpush1.bf16.msra.mxu0 0
    %373 = vmatprep.subr.bf16.mxu0 0
    %374 = vmatpush1.bf16.msra.mxu0 0
    %375 = vmatprep.subr.bf16.mxu0 0
    %376 = vmatpush1.bf16.msra.mxu0 0
    %377 = vmatprep.subr.bf16.mxu0 %v300
    %378 = vmatpush1.bf16.msra.mxu0 %v299
    %379 = vmatprep.subr.bf16.mxu0 %v293
    %380 = vmatpush1.bf16.msra.mxu0 %v292
    %381 = vmatprep.subr.bf16.mxu0 0
    %382 = vmatpush2.bf16.msra.mxu0 0
    %383 = vmatprep.subr.bf16.mxu0 0
    %384 = vmatpush2.bf16.msra.mxu0 0
    %385 = vmatprep.subr.bf16.mxu0 0
    %386 = vmatpush2.bf16.msra.mxu0 0
    %387 = vmatprep.subr.bf16.mxu0 0
    %388 = vmatpush2.bf16.msra.mxu0 0
    %389 = vmatprep.subr.bf16.mxu0 0
    %390 = vmatpush2.bf16.msra.mxu0 0
    %391 = vmatprep.subr.bf16.mxu0 0
    %392 = vmatpush2.bf16.msra.mxu0 0
    %393 = vmatprep.subr.bf16.mxu0 0
    %394 = vmatpush2.bf16.msra.mxu0 0
    %395 = vmatprep.subr.bf16.mxu0 0
    %396 = vmatpush2.bf16.msra.mxu0 0
    %397 = vmatprep.mubr.bf16.mxu0 0
    %398 = vmatmul.mubr.bf16.gmra.mxu0 %v320
    %v399 = vpop.f32.mrf.mxu0
    %v400 = vadd.f32 %v217, %v399
    %v401 = vpop.f32.mrf.mxu0
    %v402 = vadd.f32 %v221, %v401
    %v403 = vpop.f32.mrf.mxu0
    %v404 = vadd.f32 %v217, %v403
    %v405 = vpop.f32.mrf.mxu0
    %v406 = vadd.f32 %v221, %v405
    %407 = vdwg.mxu0
    %408 = vmatprep.subr.bf16.mxu0 0
    %409 = vmatpush1.bf16.msra.mxu0 0
    %410 = vmatprep.subr.bf16.mxu0 0
    %411 = vmatpush1.bf16.msra.mxu0 0
    %412 = vmatprep.subr.bf16.mxu0 0
    %413 = vmatpush1.bf16.msra.mxu0 0
    %414 = vmatprep.subr.bf16.mxu0 0
    %415 = vmatpush1.bf16.msra.mxu0 0
    %416 = vmatprep.subr.bf16.mxu0 0
    %417 = vmatpush1.bf16.msra.mxu0 0
    %418 = vmatprep.subr.bf16.mxu0 0
    %419 = vmatpush1.bf16.msra.mxu0 0
    %420 = vmatprep.subr.bf16.mxu0 %v302
    %421 = vmatpush1.bf16.msra.mxu0 %v301
    %422 = vmatprep.subr.bf16.mxu0 %v295
    %423 = vmatpush1.bf16.msra.mxu0 %v294
    %424 = vmatprep.subr.bf16.mxu0 0
    %425 = vmatpush2.bf16.msra.mxu0 0
    %426 = vmatprep.subr.bf16.mxu0 0
    %427 = vmatpush2.bf16.msra.mxu0 0
    %428 = vmatprep.subr.bf16.mxu0 0
    %429 = vmatpush2.bf16.msra.mxu0 0
    %430 = vmatprep.subr.bf16.mxu0 0
    %431 = vmatpush2.bf16.msra.mxu0 0
    %432 = vmatprep.subr.bf16.mxu0 0
    %433 = vmatpush2.bf16.msra.mxu0 0
    %434 = vmatprep.subr.bf16.mxu0 0
    %435 = vmatpush2.bf16.msra.mxu0 0
    %436 = vmatprep.subr.bf16.mxu0 0
    %437 = vmatpush2.bf16.msra.mxu0 0
    %438 = vmatprep.subr.bf16.mxu0 0
    %439 = vmatpush2.bf16.msra.mxu0 0
    %440 = vmatprep.mubr.bf16.mxu0 0
    %441 = vmatmul.mubr.bf16.gmra.mxu0 %v320
    %v442 = vpop.f32.mrf.mxu0
    %v443 = vadd.f32 %v225, %v442
    %v444 = vpop.f32.mrf.mxu0
    %v445 = vadd.f32 %v229, %v444
    %v446 = vpop.f32.mrf.mxu0
    %v447 = vadd.f32 %v225, %v446
    %v448 = vpop.f32.mrf.mxu0
    %v449 = vadd.f32 %v229, %v448
    %450 = vdwg.mxu0
    %451 = vmatprep.subr.bf16.mxu0 0
    %452 = vmatpush1.bf16.msra.mxu0 0
    %453 = vmatprep.subr.bf16.mxu0 0
    %454 = vmatpush1.bf16.msra.mxu0 0
    %455 = vmatprep.subr.bf16.mxu0 0
    %456 = vmatpush1.bf16.msra.mxu0 0
    %457 = vmatprep.subr.bf16.mxu0 0
    %458 = vmatpush1.bf16.msra.mxu0 0
    %459 = vmatprep.subr.bf16.mxu0 0
    %460 = vmatpush1.bf16.msra.mxu0 0
    %461 = vmatprep.subr.bf16.mxu0 0
    %462 = vmatpush1.bf16.msra.mxu0 0
    %463 = vmatprep.subr.bf16.mxu0 0
    %464 = vmatpush1.bf16.msra.mxu0 %v303
    %465 = vmatprep.subr.bf16.mxu0 0
    %466 = vmatpush1.bf16.msra.mxu0 %v296
    %467 = vmatprep.subr.bf16.mxu0 0
    %468 = vmatpush2.bf16.msra.mxu0 0
    %469 = vmatprep.subr.bf16.mxu0 0
    %470 = vmatpush2.bf16.msra.mxu0 0
    %471 = vmatprep.subr.bf16.mxu0 0
    %472 = vmatpush2.bf16.msra.mxu0 0
    %473 = vmatprep.subr.bf16.mxu0 0
    %474 = vmatpush2.bf16.msra.mxu0 0
    %475 = vmatprep.subr.bf16.mxu0 0
    %476 = vmatpush2.bf16.msra.mxu0 0
    %477 = vmatprep.subr.bf16.mxu0 0
    %478 = vmatpush2.bf16.msra.mxu0 0
    %479 = vmatprep.subr.bf16.mxu0 0
    %480 = vmatpush2.bf16.msra.mxu0 0
    %481 = vmatprep.subr.bf16.mxu0 0
    %482 = vmatpush2.bf16.msra.mxu0 0
    %483 = vmatprep.mubr.bf16.mxu0 0
    %484 = vmatmul.mubr.bf16.gmra.mxu0 %v320
    %v485 = vpop.f32.mrf.mxu0
    %v486 = vadd.f32 %v233, %v485
    %v487 = vpop.f32.mrf.mxu0
    %v488 = vpop.f32.mrf.mxu0
    %v489 = vadd.f32 %v233, %v488
    %v490 = vpop.f32.mrf.mxu0
    %491 = vdwg.mxu0
    %s492 = sld [smem:[#allocation2]]
    %v493 = vstv %s492
    %v494 = vmul.f32 %v493, %v357
    %v495 = vmul.f32 %v493, %v359
    %v496 = vmul.f32 %v493, %v400
    %v497 = vmul.f32 %v493, %v402
    %v498 = vmul.f32 %v493, %v443
    %v499 = vmul.f32 %v493, %v445
    %v500 = vmul.f32 %v493, %v486
    %v501 = vmul.f32 %v493, %v361
    %v502 = vmul.f32 %v493, %v363
    %v503 = vmul.f32 %v493, %v404
    %v504 = vmul.f32 %v493, %v406
    %v505 = vmul.f32 %v493, %v447
    %v506 = vmul.f32 %v493, %v449
    %v507 = vmul.f32 %v493, %v489
    %v508 = vmax.f32 %v357, %v494
    %v509 = vmax.f32 %v359, %v495
    %v510 = vmax.f32 %v400, %v496
    %v511 = vmax.f32 %v402, %v497
    %v512 = vmax.f32 %v443, %v498
    %v513 = vmax.f32 %v445, %v499
    %v514 = vmax.f32 %v486, %v500
    %v515 = vmax.f32 %v361, %v501
    %v516 = vmax.f32 %v363, %v502
    %v517 = vmax.f32 %v404, %v503
    %v518 = vmax.f32 %v406, %v504
    %v519 = vmax.f32 %v447, %v505
    %v520 = vmax.f32 %v449, %v506
    %v521 = vmax.f32 %v489, %v507
    %v522 = vpack.c.bf16 %v515, %v508
    %v523 = vpack.c.bf16 %v516, %v509
    %v524 = vpack.c.bf16 %v517, %v510
    %v525 = vpack.c.bf16 %v518, %v511
    %v526 = vpack.c.bf16 %v519, %v512
    %v527 = vpack.c.bf16 %v520, %v513
    %v528 = vpack.c.bf16 %v521, %v514
    %v529 = vld [vmem:[#allocation10] sm:$0xff]
    %v530 = vld [vmem:[#allocation10 + $0x8] sm:$0xff]
    %v531 = vld [vmem:[#allocation10 + $0x10] sm:$0xff]
    %v532 = vld [vmem:[#allocation10 + $0x18] sm:$0xff]
    %v533 = vld [vmem:[#allocation10 + $0x20] sm:$0xff]
    %v534 = vld [vmem:[#allocation10 + $0x28] sm:$0xff]
    %v535 = vld [vmem:[#allocation10 + $0x30] sm:$0xff]
    %v536 = vld [vmem:[#allocation10 + $0x38] sm:$0xff]
    %v537 = vld [vmem:[#allocation10 + $0x40] sm:$0xff]
    %v538 = vld [vmem:[#allocation10 + $0x48] sm:$0xff]
    %v539 = vld [vmem:[#allocation10 + $0x50] sm:$0xff]
    %v540 = vld [vmem:[#allocation10 + $0x58] sm:$0xff]
    %v541 = vld [vmem:[#allocation10 + $0x60] sm:$0xff]
    %v542 = vld [vmem:[#allocation10 + $0x68] sm:$0xff]
    %v543 = vld [vmem:[#allocation10 + $0x70] sm:$0xff]
    %v544 = vld [vmem:[#allocation10 + $0x78] sm:$0xff]
    %v545 = vld [vmem:[#allocation10 + $0x80] sm:$0xff]
    %v546 = vld [vmem:[#allocation10 + $0x88] sm:$0xff]
    %v547 = vld [vmem:[#allocation10 + $0x90] sm:$0xff]
    %v548 = vld [vmem:[#allocation10 + $0x98] sm:$0xff]
    %v549 = vld [vmem:[#allocation10 + $0xa0] sm:$0xff]
    %v550 = vld [vmem:[#allocation10 + $0xa8] sm:$0xff]
    %v551 = vld [vmem:[#allocation10 + $0xb0] sm:$0xff]
    %v552 = vld [vmem:[#allocation10 + $0xb8] sm:$0xff]
    %v553 = vld [vmem:[#allocation10 + $0xc0] sm:$0xff]
    %v554 = vld [vmem:[#allocation10 + $0xc8] sm:$0xff]
    %v555 = vld [vmem:[#allocation10 + $0xd0] sm:$0xff]
    %v556 = vld [vmem:[#allocation10 + $0xd8] sm:$0xff]
    %v557 = vld [vmem:[#allocation10 + $0xe0] sm:$0xff]
    %v558 = vld [vmem:[#allocation10 + $0xe8] sm:$0xff]
    %v559 = vld [vmem:[#allocation10 + $0xf0] sm:$0xff]
    %v560 = vld [vmem:[#allocation10 + $0xf8] sm:$0xff]
    %v561 = vld [vmem:[#allocation10 + $0x100] sm:$0xff]
    %v562 = vld [vmem:[#allocation10 + $0x108] sm:$0xff]
    %v563 = vld [vmem:[#allocation10 + $0x110] sm:$0xff]
    %v564 = vld [vmem:[#allocation10 + $0x118] sm:$0xff]
    %v565 = vld [vmem:[#allocation10 + $0x120] sm:$0xff]
    %v566 = vld [vmem:[#allocation10 + $0x128] sm:$0xff]
    %v567 = vld [vmem:[#allocation10 + $0x130] sm:$0xff]
    %v568 = vld [vmem:[#allocation10 + $0x138] sm:$0xff]
    %v569 = vld [vmem:[#allocation10 + $0x140] sm:$0xff]
    %v570 = vld [vmem:[#allocation10 + $0x148] sm:$0xff]
    %v571 = vld [vmem:[#allocation10 + $0x150] sm:$0xff]
    %v572 = vld [vmem:[#allocation10 + $0x158] sm:$0xff]
    %v573 = vld [vmem:[#allocation10 + $0x160] sm:$0xff]
    %v574 = vld [vmem:[#allocation10 + $0x168] sm:$0xff]
    %v575 = vld [vmem:[#allocation10 + $0x170] sm:$0xff]
    %v576 = vld [vmem:[#allocation10 + $0x178] sm:$0xff]
    %v577 = vld [vmem:[#allocation10 + $0x180] sm:$0xff]
    %v578 = vld [vmem:[#allocation10 + $0x188] sm:$0xff]
    %v579 = vld [vmem:[#allocation10 + $0x190] sm:$0xff]
    %v580 = vld [vmem:[#allocation10 + $0x198] sm:$0xff]
    %v581 = vld [vmem:[#allocation10 + $0x1a0] sm:$0xff]
    %v582 = vld [vmem:[#allocation10 + $0x1a8] sm:$0xff]
    %v583 = vld [vmem:[#allocation10 + $0x1b0] sm:$0xff]
    %v584 = vld [vmem:[#allocation10 + $0x1b8] sm:$0xff]
    %v585 = vld [vmem:[#allocation10 + $0x1c0] sm:$0xff]
    %v586 = vld [vmem:[#allocation10 + $0x1c8] sm:$0xff]
    %v587 = vld [vmem:[#allocation10 + $0x1d0] sm:$0xff]
    %v588 = vld [vmem:[#allocation10 + $0x1d8] sm:$0xff]
    %v589 = vld [vmem:[#allocation10 + $0x1e0] sm:$0xff]
    %v590 = vld [vmem:[#allocation10 + $0x1e8] sm:$0xff]
    %v591 = vld [vmem:[#allocation10 + $0x1f0] sm:$0xff]
    %v592 = vld [vmem:[#allocation10 + $0x1f8] sm:$0xff]
    %v593 = vld [vmem:[#allocation10 + $0x200] sm:$0xff]
    %v594 = vld [vmem:[#allocation10 + $0x208] sm:$0xff]
    %v595 = vld [vmem:[#allocation10 + $0x210] sm:$0xff]
    %v596 = vld [vmem:[#allocation10 + $0x218] sm:$0xff]
    %v597 = vld [vmem:[#allocation10 + $0x220] sm:$0xff]
    %v598 = vld [vmem:[#allocation10 + $0x228] sm:$0xff]
    %v599 = vld [vmem:[#allocation10 + $0x230] sm:$0xff]
    %v600 = vld [vmem:[#allocation10 + $0x238] sm:$0xff]
    %v601 = vld [vmem:[#allocation10 + $0x240] sm:$0xff]
    %v602 = vld [vmem:[#allocation10 + $0x248] sm:$0xff]
    %v603 = vld [vmem:[#allocation10 + $0x250] sm:$0xff]
    %v604 = vld [vmem:[#allocation10 + $0x258] sm:$0xff]
    %v605 = vld [vmem:[#allocation10 + $0x260] sm:$0xff]
    %v606 = vld [vmem:[#allocation10 + $0x268] sm:$0xff]
    %v607 = vld [vmem:[#allocation10 + $0x270] sm:$0xff]
    %v608 = vld [vmem:[#allocation10 + $0x278] sm:$0xff]
    %v609 = vld [vmem:[#allocation10 + $0x280] sm:$0xff]
    %v610 = vld [vmem:[#allocation10 + $0x288] sm:$0xff]
    %v611 = vld [vmem:[#allocation10 + $0x290] sm:$0xff]
    %v612 = vld [vmem:[#allocation10 + $0x298] sm:$0xff]
    %v613 = vld [vmem:[#allocation10 + $0x2a0] sm:$0xff]
    %v614 = vld [vmem:[#allocation10 + $0x2a8] sm:$0xff]
    %v615 = vld [vmem:[#allocation10 + $0x2b0] sm:$0xff]
    %v616 = vld [vmem:[#allocation10 + $0x2b8] sm:$0xff]
    %v617 = vld [vmem:[#allocation10 + $0x2c0] sm:$0xff]
    %v618 = vld [vmem:[#allocation10 + $0x2c8] sm:$0xff]
    %v619 = vld [vmem:[#allocation10 + $0x2d0] sm:$0xff]
    %v620 = vld [vmem:[#allocation10 + $0x2d8] sm:$0xff]
    %v621 = vld [vmem:[#allocation10 + $0x2e0] sm:$0xff]
    %v622 = vld [vmem:[#allocation10 + $0x2e8] sm:$0xff]
    %v623 = vld [vmem:[#allocation10 + $0x2f0] sm:$0xff]
    %v624 = vld [vmem:[#allocation10 + $0x2f8] sm:$0xff]
    %v625 = vld [vmem:[#allocation10 + $0x300] sm:$0xff]
    %v626 = vld [vmem:[#allocation10 + $0x308] sm:$0xff]
    %v627 = vld [vmem:[#allocation10 + $0x310] sm:$0xff]
    %v628 = vld [vmem:[#allocation10 + $0x318] sm:$0xff]
    %v629 = vld [vmem:[#allocation10 + $0x320] sm:$0xff]
    %v630 = vld [vmem:[#allocation10 + $0x328] sm:$0xff]
    %v631 = vld [vmem:[#allocation10 + $0x330] sm:$0xff]
    %v632 = vld [vmem:[#allocation10 + $0x338] sm:$0xff]
    %v633 = vld [vmem:[#allocation10 + $0x340] sm:$0xff]
    %v634 = vld [vmem:[#allocation10 + $0x348] sm:$0xff]
    %v635 = vld [vmem:[#allocation10 + $0x350] sm:$0xff]
    %v636 = vld [vmem:[#allocation10 + $0x358] sm:$0xff]
    %v637 = vld [vmem:[#allocation10 + $0x360] sm:$0xff]
    %v638 = vld [vmem:[#allocation10 + $0x368] sm:$0xff]
    %v639 = vld [vmem:[#allocation10 + $0x370] sm:$0xff]
    %v640 = vld [vmem:[#allocation10 + $0x378] sm:$0xff]
    %v641 = vld [vmem:[#allocation10 + $0x380] sm:$0xff]
    %v642 = vld [vmem:[#allocation10 + $0x388] sm:$0xff]
    %v643 = vld [vmem:[#allocation10 + $0x390] sm:$0xff]
    %v644 = vld [vmem:[#allocation10 + $0x398] sm:$0xff]
    %v645 = vld [vmem:[#allocation10 + $0x3a0] sm:$0xff]
    %v646 = vld [vmem:[#allocation10 + $0x3a8] sm:$0xff]
    %v647 = vld [vmem:[#allocation10 + $0x3b0] sm:$0xff]
    %v648 = vld [vmem:[#allocation10 + $0x3b8] sm:$0xff]
    %v649 = vld [vmem:[#allocation10 + $0x3c0] sm:$0xff]
    %v650 = vld [vmem:[#allocation10 + $0x3c8] sm:$0xff]
    %v651 = vld [vmem:[#allocation10 + $0x3d0] sm:$0xff]
    %v652 = vld [vmem:[#allocation10 + $0x3d8] sm:$0xff]
    %v653 = vld [vmem:[#allocation10 + $0x3e0] sm:$0xff]
    %v654 = vld [vmem:[#allocation10 + $0x3e8] sm:$0xff]
    %v655 = vld [vmem:[#allocation10 + $0x3f0] sm:$0xff]
    %v656 = vld [vmem:[#allocation10 + $0x3f8] sm:$0xff]
    %v657 = vld [vmem:[#allocation10 + $0x400] sm:$0xff]
    %v658 = vld [vmem:[#allocation10 + $0x408] sm:$0xff]
    %v659 = vld [vmem:[#allocation10 + $0x410] sm:$0xff]
    %v660 = vld [vmem:[#allocation10 + $0x418] sm:$0xff]
    %v661 = vld [vmem:[#allocation10 + $0x420] sm:$0xff]
    %v662 = vld [vmem:[#allocation10 + $0x428] sm:$0xff]
    %v663 = vld [vmem:[#allocation10 + $0x430] sm:$0xff]
    %v664 = vld [vmem:[#allocation10 + $0x438] sm:$0xff]
    %v665 = vld [vmem:[#allocation10 + $0x440] sm:$0xff]
    %v666 = vld [vmem:[#allocation10 + $0x448] sm:$0xff]
    %v667 = vld [vmem:[#allocation10 + $0x450] sm:$0xff]
    %v668 = vld [vmem:[#allocation10 + $0x458] sm:$0xff]
    %v669 = vld [vmem:[#allocation10 + $0x460] sm:$0xff]
    %v670 = vld [vmem:[#allocation10 + $0x468] sm:$0xff]
    %v671 = vld [vmem:[#allocation10 + $0x470] sm:$0xff]
    %v672 = vld [vmem:[#allocation10 + $0x478] sm:$0xff]
    %v673 = vld [vmem:[#allocation10 + $0x480] sm:$0xff]
    %v674 = vld [vmem:[#allocation10 + $0x488] sm:$0xff]
    %v675 = vld [vmem:[#allocation10 + $0x490] sm:$0xff]
    %v676 = vld [vmem:[#allocation10 + $0x498] sm:$0xff]
    %v677 = vld [vmem:[#allocation10 + $0x4a0] sm:$0xff]
    %v678 = vld [vmem:[#allocation10 + $0x4a8] sm:$0xff]
    %v679 = vld [vmem:[#allocation10 + $0x4b0] sm:$0xff]
    %v680 = vld [vmem:[#allocation10 + $0x4b8] sm:$0xff]
    %v681 = vld [vmem:[#allocation10 + $0x4c0] sm:$0xff]
    %v682 = vld [vmem:[#allocation10 + $0x4c8] sm:$0xff]
    %v683 = vld [vmem:[#allocation10 + $0x4d0] sm:$0xff]
    %v684 = vld [vmem:[#allocation10 + $0x4d8] sm:$0xff]
    %v685 = vld [vmem:[#allocation10 + $0x4e0] sm:$0xff]
    %v686 = vld [vmem:[#allocation10 + $0x4e8] sm:$0xff]
    %v687 = vld [vmem:[#allocation10 + $0x4f0] sm:$0xff]
    %v688 = vld [vmem:[#allocation10 + $0x4f8] sm:$0xff]
    %v689 = vld [vmem:[#allocation10 + $0x500] sm:$0xff]
    %v690 = vld [vmem:[#allocation10 + $0x508] sm:$0xff]
    %v691 = vld [vmem:[#allocation10 + $0x510] sm:$0xff]
    %v692 = vld [vmem:[#allocation10 + $0x518] sm:$0xff]
    %v693 = vld [vmem:[#allocation10 + $0x520] sm:$0xff]
    %v694 = vld [vmem:[#allocation10 + $0x528] sm:$0xff]
    %v695 = vld [vmem:[#allocation10 + $0x530] sm:$0xff]
    %v696 = vld [vmem:[#allocation10 + $0x538] sm:$0xff]
    %v697 = vld [vmem:[#allocation10 + $0x540] sm:$0xff]
    %v698 = vld [vmem:[#allocation10 + $0x548] sm:$0xff]
    %v699 = vld [vmem:[#allocation10 + $0x550] sm:$0xff]
    %v700 = vld [vmem:[#allocation10 + $0x558] sm:$0xff]
    %v701 = vld [vmem:[#allocation10 + $0x560] sm:$0xff]
    %v702 = vld [vmem:[#allocation10 + $0x568] sm:$0xff]
    %v703 = vld [vmem:[#allocation10 + $0x570] sm:$0xff]
    %v704 = vld [vmem:[#allocation10 + $0x578] sm:$0xff]
    %v705 = vld [vmem:[#allocation10 + $0x580] sm:$0xff]
    %v706 = vld [vmem:[#allocation10 + $0x588] sm:$0xff]
    %v707 = vld [vmem:[#allocation10 + $0x590] sm:$0xff]
    %v708 = vld [vmem:[#allocation10 + $0x598] sm:$0xff]
    %v709 = vld [vmem:[#allocation10 + $0x5a0] sm:$0xff]
    %v710 = vld [vmem:[#allocation10 + $0x5a8] sm:$0xff]
    %v711 = vld [vmem:[#allocation10 + $0x5b0] sm:$0xff]
    %v712 = vld [vmem:[#allocation10 + $0x5b8] sm:$0xff]
    %v713 = vld [vmem:[#allocation10 + $0x5c0] sm:$0xff]
    %v714 = vld [vmem:[#allocation10 + $0x5c8] sm:$0xff]
    %v715 = vld [vmem:[#allocation10 + $0x5d0] sm:$0xff]
    %v716 = vld [vmem:[#allocation10 + $0x5d8] sm:$0xff]
    %v717 = vld [vmem:[#allocation10 + $0x5e0] sm:$0xff]
    %v718 = vld [vmem:[#allocation10 + $0x5e8] sm:$0xff]
    %v719 = vld [vmem:[#allocation10 + $0x5f0] sm:$0xff]
    %v720 = vld [vmem:[#allocation10 + $0x5f8] sm:$0xff]
    %v721 = vld [vmem:[#allocation10 + $0x600] sm:$0xff]
    %v722 = vld [vmem:[#allocation10 + $0x608] sm:$0xff]
    %v723 = vld [vmem:[#allocation10 + $0x610] sm:$0xff]
    %v724 = vld [vmem:[#allocation10 + $0x618] sm:$0xff]
    %v725 = vld [vmem:[#allocation10 + $0x620] sm:$0xff]
    %v726 = vld [vmem:[#allocation10 + $0x628] sm:$0xff]
    %v727 = vld [vmem:[#allocation10 + $0x630] sm:$0xff]
    %v728 = vld [vmem:[#allocation10 + $0x638] sm:$0xff]
    %v729 = vld [vmem:[#allocation10 + $0x640] sm:$0xff]
    %v730 = vld [vmem:[#allocation10 + $0x648] sm:$0xff]
    %v731 = vld [vmem:[#allocation10 + $0x650] sm:$0xff]
    %v732 = vld [vmem:[#allocation10 + $0x658] sm:$0xff]
    %v733 = vld [vmem:[#allocation10 + $0x660] sm:$0xff]
    %v734 = vld [vmem:[#allocation10 + $0x668] sm:$0xff]
    %v735 = vld [vmem:[#allocation10 + $0x670] sm:$0xff]
    %v736 = vld [vmem:[#allocation10 + $0x678] sm:$0xff]
    %v737 = vld [vmem:[#allocation10 + $0x680] sm:$0xff]
    %v738 = vld [vmem:[#allocation10 + $0x688] sm:$0xff]
    %v739 = vld [vmem:[#allocation10 + $0x690] sm:$0xff]
    %v740 = vld [vmem:[#allocation10 + $0x698] sm:$0xff]
    %v741 = vld [vmem:[#allocation10 + $0x6a0] sm:$0xff]
    %v742 = vld [vmem:[#allocation10 + $0x6a8] sm:$0xff]
    %v743 = vld [vmem:[#allocation10 + $0x6b0] sm:$0xff]
    %v744 = vld [vmem:[#allocation10 + $0x6b8] sm:$0xff]
    %v745 = vld [vmem:[#allocation10 + $0x6c0] sm:$0xff]
    %v746 = vld [vmem:[#allocation10 + $0x6c8] sm:$0xff]
    %v747 = vld [vmem:[#allocation10 + $0x6d0] sm:$0xff]
    %v748 = vld [vmem:[#allocation10 + $0x6d8] sm:$0xff]
    %v749 = vld [vmem:[#allocation10 + $0x6e0] sm:$0xff]
    %v750 = vld [vmem:[#allocation10 + $0x6e8] sm:$0xff]
    %v751 = vld [vmem:[#allocation10 + $0x6f0] sm:$0xff]
    %v752 = vld [vmem:[#allocation10 + $0x6f8] sm:$0xff]
    %v753 = vld [vmem:[%s5] sm:$0xf]
    %v755 = vlaneseq
    %v756 = vshrl.u32 %v755, 7
    %v757 = vsub.s32 0, %v756
    %v758 = vrot.slane %v753, %v757
    %v759 = vlaneseq
    %v760 = vshrl.u32 %v759, 7
    %v761 = vsub.s32 1, %v760
    %v762 = vrot.slane %v753, %v761
    %v763 = vlaneseq
    %v764 = vshrl.u32 %v763, 7
    %v765 = vsub.s32 2, %v764
    %v766 = vrot.slane %v753, %v765
    %v767 = vlaneseq
    %v768 = vshrl.u32 %v767, 7
    %v769 = vsub.s32 3, %v768
    %v770 = vrot.slane %v753, %v769
    %v999 = vunpack.c.l.b16 %v529
    %v1000 = vunpack.c.h.b16 %v529
    %v1001 = vunpack.c.l.b16 %v530
    %v1002 = vunpack.c.h.b16 %v530
    %v1003 = vunpack.c.l.b16 %v531
    %v1004 = vunpack.c.h.b16 %v531
    %v1005 = vunpack.c.l.b16 %v532
    %v1006 = vunpack.c.h.b16 %v532
    %v1007 = vunpack.c.l.b16 %v533
    %v1008 = vunpack.c.h.b16 %v533
    %v1009 = vunpack.c.l.b16 %v534
    %v1010 = vunpack.c.h.b16 %v534
    %v1011 = vunpack.c.l.b16 %v535
    %v1012 = vunpack.c.h.b16 %v535
    %v1013 = vunpack.c.l.b16 %v536
    %v1014 = vunpack.c.h.b16 %v536
    %v1015 = vunpack.c.l.b16 %v537
    %v1016 = vunpack.c.h.b16 %v537
    %v1017 = vunpack.c.l.b16 %v538
    %v1018 = vunpack.c.h.b16 %v538
    %v1019 = vunpack.c.l.b16 %v539
    %v1020 = vunpack.c.h.b16 %v539
    %v1021 = vunpack.c.l.b16 %v540
    %v1022 = vunpack.c.h.b16 %v540
    %v1023 = vunpack.c.l.b16 %v541
    %v1024 = vunpack.c.h.b16 %v541
    %v1025 = vunpack.c.l.b16 %v542
    %v1026 = vunpack.c.h.b16 %v542
    %v1027 = vunpack.c.l.b16 %v543
    %v1028 = vunpack.c.h.b16 %v543
    %v1029 = vunpack.c.l.b16 %v544
    %v1030 = vunpack.c.h.b16 %v544
    %v1031 = vunpack.c.l.b16 %v545
    %v1032 = vunpack.c.h.b16 %v545
    %v1033 = vunpack.c.l.b16 %v546
    %v1034 = vunpack.c.h.b16 %v546
    %v1035 = vunpack.c.l.b16 %v547
    %v1036 = vunpack.c.h.b16 %v547
    %v1037 = vunpack.c.l.b16 %v548
    %v1038 = vunpack.c.h.b16 %v548
    %v1039 = vunpack.c.l.b16 %v549
    %v1040 = vunpack.c.h.b16 %v549
    %v1041 = vunpack.c.l.b16 %v550
    %v1042 = vunpack.c.h.b16 %v550
    %v1043 = vunpack.c.l.b16 %v551
    %v1044 = vunpack.c.h.b16 %v551
    %v1045 = vunpack.c.l.b16 %v552
    %v1046 = vunpack.c.h.b16 %v552
    %v1047 = vunpack.c.l.b16 %v553
    %v1048 = vunpack.c.h.b16 %v553
    %v1049 = vunpack.c.l.b16 %v554
    %v1050 = vunpack.c.h.b16 %v554
    %v1051 = vunpack.c.l.b16 %v555
    %v1052 = vunpack.c.h.b16 %v555
    %v1053 = vunpack.c.l.b16 %v556
    %v1054 = vunpack.c.h.b16 %v556
    %v1055 = vunpack.c.l.b16 %v557
    %v1056 = vunpack.c.h.b16 %v557
    %v1057 = vunpack.c.l.b16 %v558
    %v1058 = vunpack.c.h.b16 %v558
    %v1059 = vunpack.c.l.b16 %v559
    %v1060 = vunpack.c.h.b16 %v559
    %v1061 = vunpack.c.l.b16 %v560
    %v1062 = vunpack.c.h.b16 %v560
    %v1063 = vunpack.c.l.b16 %v561
    %v1064 = vunpack.c.h.b16 %v561
    %v1065 = vunpack.c.l.b16 %v562
    %v1066 = vunpack.c.h.b16 %v562
    %v1067 = vunpack.c.l.b16 %v563
    %v1068 = vunpack.c.h.b16 %v563
    %v1069 = vunpack.c.l.b16 %v564
    %v1070 = vunpack.c.h.b16 %v564
    %v1071 = vunpack.c.l.b16 %v565
    %v1072 = vunpack.c.h.b16 %v565
    %v1073 = vunpack.c.l.b16 %v566
    %v1074 = vunpack.c.h.b16 %v566
    %v1075 = vunpack.c.l.b16 %v567
    %v1076 = vunpack.c.h.b16 %v567
    %v1077 = vunpack.c.l.b16 %v568
    %v1078 = vunpack.c.h.b16 %v568
    %v1079 = vunpack.c.l.b16 %v569
    %v1080 = vunpack.c.h.b16 %v569
    %v1081 = vunpack.c.l.b16 %v570
    %v1082 = vunpack.c.h.b16 %v570
    %v1083 = vunpack.c.l.b16 %v571
    %v1084 = vunpack.c.h.b16 %v571
    %v1085 = vunpack.c.l.b16 %v572
    %v1086 = vunpack.c.h.b16 %v572
    %v1087 = vunpack.c.l.b16 %v573
    %v1088 = vunpack.c.h.b16 %v573
    %v1089 = vunpack.c.l.b16 %v574
    %v1090 = vunpack.c.h.b16 %v574
    %v1091 = vunpack.c.l.b16 %v575
    %v1092 = vunpack.c.h.b16 %v575
    %v1093 = vunpack.c.l.b16 %v576
    %v1094 = vunpack.c.h.b16 %v576
    %v1095 = vunpack.c.l.b16 %v577
    %v1096 = vunpack.c.h.b16 %v577
    %v1097 = vunpack.c.l.b16 %v578
    %v1098 = vunpack.c.h.b16 %v578
    %v1099 = vunpack.c.l.b16 %v579
    %v1100 = vunpack.c.h.b16 %v579
    %v1101 = vunpack.c.l.b16 %v580
    %v1102 = vunpack.c.h.b16 %v580
    %v1103 = vunpack.c.l.b16 %v581
    %v1104 = vunpack.c.h.b16 %v581
    %v1105 = vunpack.c.l.b16 %v582
    %v1106 = vunpack.c.h.b16 %v582
    %v1107 = vunpack.c.l.b16 %v583
    %v1108 = vunpack.c.h.b16 %v583
    %v1109 = vunpack.c.l.b16 %v584
    %v1110 = vunpack.c.h.b16 %v584
    %v1111 = vunpack.c.l.b16 %v585
    %v1112 = vunpack.c.h.b16 %v585
    %v1113 = vunpack.c.l.b16 %v586
    %v1114 = vunpack.c.h.b16 %v586
    %v1115 = vunpack.c.l.b16 %v587
    %v1116 = vunpack.c.h.b16 %v587
    %v1117 = vunpack.c.l.b16 %v588
    %v1118 = vunpack.c.h.b16 %v588
    %v1119 = vunpack.c.l.b16 %v589
    %v1120 = vunpack.c.h.b16 %v589
    %v1121 = vunpack.c.l.b16 %v590
    %v1122 = vunpack.c.h.b16 %v590
    %v1123 = vunpack.c.l.b16 %v591
    %v1124 = vunpack.c.h.b16 %v591
    %v1125 = vunpack.c.l.b16 %v592
    %v1126 = vunpack.c.h.b16 %v592
    %v1127 = vunpack.c.l.b16 %v593
    %v1128 = vunpack.c.h.b16 %v593
    %v1129 = vunpack.c.l.b16 %v594
    %v1130 = vunpack.c.h.b16 %v594
    %v1131 = vunpack.c.l.b16 %v595
    %v1132 = vunpack.c.h.b16 %v595
    %v1133 = vunpack.c.l.b16 %v596
    %v1134 = vunpack.c.h.b16 %v596
    %v1135 = vunpack.c.l.b16 %v597
    %v1136 = vunpack.c.h.b16 %v597
    %v1137 = vunpack.c.l.b16 %v598
    %v1138 = vunpack.c.h.b16 %v598
    %v1139 = vunpack.c.l.b16 %v599
    %v1140 = vunpack.c.h.b16 %v599
    %v1141 = vunpack.c.l.b16 %v600
    %v1142 = vunpack.c.h.b16 %v600
    %v1143 = vunpack.c.l.b16 %v601
    %v1144 = vunpack.c.h.b16 %v601
    %v1145 = vunpack.c.l.b16 %v602
    %v1146 = vunpack.c.h.b16 %v602
    %v1147 = vunpack.c.l.b16 %v603
    %v1148 = vunpack.c.h.b16 %v603
    %v1149 = vunpack.c.l.b16 %v604
    %v1150 = vunpack.c.h.b16 %v604
    %v1151 = vunpack.c.l.b16 %v605
    %v1152 = vunpack.c.h.b16 %v605
    %v1153 = vunpack.c.l.b16 %v606
    %v1154 = vunpack.c.h.b16 %v606
    %v1155 = vunpack.c.l.b16 %v607
    %v1156 = vunpack.c.h.b16 %v607
    %v1157 = vunpack.c.l.b16 %v608
    %v1158 = vunpack.c.h.b16 %v608
    %v1159 = vunpack.c.l.b16 %v609
    %v1160 = vunpack.c.h.b16 %v609
    %v1161 = vunpack.c.l.b16 %v610
    %v1162 = vunpack.c.h.b16 %v610
    %v1163 = vunpack.c.l.b16 %v611
    %v1164 = vunpack.c.h.b16 %v611
    %v1165 = vunpack.c.l.b16 %v612
    %v1166 = vunpack.c.h.b16 %v612
    %v1167 = vunpack.c.l.b16 %v613
    %v1168 = vunpack.c.h.b16 %v613
    %v1169 = vunpack.c.l.b16 %v614
    %v1170 = vunpack.c.h.b16 %v614
    %v1171 = vunpack.c.l.b16 %v615
    %v1172 = vunpack.c.h.b16 %v615
    %v1173 = vunpack.c.l.b16 %v616
    %v1174 = vunpack.c.h.b16 %v616
    %v1175 = vunpack.c.l.b16 %v617
    %v1176 = vunpack.c.h.b16 %v617
    %v1177 = vunpack.c.l.b16 %v618
    %v1178 = vunpack.c.h.b16 %v618
    %v1179 = vunpack.c.l.b16 %v619
    %v1180 = vunpack.c.h.b16 %v619
    %v1181 = vunpack.c.l.b16 %v620
    %v1182 = vunpack.c.h.b16 %v620
    %v1183 = vunpack.c.l.b16 %v621
    %v1184 = vunpack.c.h.b16 %v621
    %v1185 = vunpack.c.l.b16 %v622
    %v1186 = vunpack.c.h.b16 %v622
    %v1187 = vunpack.c.l.b16 %v623
    %v1188 = vunpack.c.h.b16 %v623
    %v1189 = vunpack.c.l.b16 %v624
    %v1190 = vunpack.c.h.b16 %v624
    %v1191 = vunpack.c.l.b16 %v625
    %v1192 = vunpack.c.h.b16 %v625
    %v1193 = vunpack.c.l.b16 %v626
    %v1194 = vunpack.c.h.b16 %v626
    %v1195 = vunpack.c.l.b16 %v627
    %v1196 = vunpack.c.h.b16 %v627
    %v1197 = vunpack.c.l.b16 %v628
    %v1198 = vunpack.c.h.b16 %v628
    %v1199 = vunpack.c.l.b16 %v629
    %v1200 = vunpack.c.h.b16 %v629
    %v1201 = vunpack.c.l.b16 %v630
    %v1202 = vunpack.c.h.b16 %v630
    %v1203 = vunpack.c.l.b16 %v631
    %v1204 = vunpack.c.h.b16 %v631
    %v1205 = vunpack.c.l.b16 %v632
    %v1206 = vunpack.c.h.b16 %v632
    %v1207 = vunpack.c.l.b16 %v633
    %v1208 = vunpack.c.h.b16 %v633
    %v1209 = vunpack.c.l.b16 %v634
    %v1210 = vunpack.c.h.b16 %v634
    %v1211 = vunpack.c.l.b16 %v635
    %v1212 = vunpack.c.h.b16 %v635
    %v1213 = vunpack.c.l.b16 %v636
    %v1214 = vunpack.c.h.b16 %v636
    %v1215 = vunpack.c.l.b16 %v637
    %v1216 = vunpack.c.h.b16 %v637
    %v1217 = vunpack.c.l.b16 %v638
    %v1218 = vunpack.c.h.b16 %v638
    %v1219 = vunpack.c.l.b16 %v639
    %v1220 = vunpack.c.h.b16 %v639
    %v1221 = vunpack.c.l.b16 %v640
    %v1222 = vunpack.c.h.b16 %v640
    %v1223 = vunpack.c.l.b16 %v641
    %v1224 = vunpack.c.h.b16 %v641
    %v1225 = vunpack.c.l.b16 %v642
    %v1226 = vunpack.c.h.b16 %v642
    %v1227 = vunpack.c.l.b16 %v643
    %v1228 = vunpack.c.h.b16 %v643
    %v1229 = vunpack.c.l.b16 %v644
    %v1230 = vunpack.c.h.b16 %v644
    %v1231 = vunpack.c.l.b16 %v645
    %v1232 = vunpack.c.h.b16 %v645
    %v1233 = vunpack.c.l.b16 %v646
    %v1234 = vunpack.c.h.b16 %v646
    %v1235 = vunpack.c.l.b16 %v647
    %v1236 = vunpack.c.h.b16 %v647
    %v1237 = vunpack.c.l.b16 %v648
    %v1238 = vunpack.c.h.b16 %v648
    %v1239 = vunpack.c.l.b16 %v649
    %v1240 = vunpack.c.h.b16 %v649
    %v1241 = vunpack.c.l.b16 %v650
    %v1242 = vunpack.c.h.b16 %v650
    %v1243 = vunpack.c.l.b16 %v651
    %v1244 = vunpack.c.h.b16 %v651
    %v1245 = vunpack.c.l.b16 %v652
    %v1246 = vunpack.c.h.b16 %v652
    %v1247 = vunpack.c.l.b16 %v653
    %v1248 = vunpack.c.h.b16 %v653
    %v1249 = vunpack.c.l.b16 %v654
    %v1250 = vunpack.c.h.b16 %v654
    %v1251 = vunpack.c.l.b16 %v655
    %v1252 = vunpack.c.h.b16 %v655
    %v1253 = vunpack.c.l.b16 %v656
    %v1254 = vunpack.c.h.b16 %v656
    %v1255 = vunpack.c.l.b16 %v657
    %v1256 = vunpack.c.h.b16 %v657
    %v1257 = vunpack.c.l.b16 %v658
    %v1258 = vunpack.c.h.b16 %v658
    %v1259 = vunpack.c.l.b16 %v659
    %v1260 = vunpack.c.h.b16 %v659
    %v1261 = vunpack.c.l.b16 %v660
    %v1262 = vunpack.c.h.b16 %v660
    %v1263 = vunpack.c.l.b16 %v661
    %v1264 = vunpack.c.h.b16 %v661
    %v1265 = vunpack.c.l.b16 %v662
    %v1266 = vunpack.c.h.b16 %v662
    %v1267 = vunpack.c.l.b16 %v663
    %v1268 = vunpack.c.h.b16 %v663
    %v1269 = vunpack.c.l.b16 %v664
    %v1270 = vunpack.c.h.b16 %v664
    %v1271 = vunpack.c.l.b16 %v665
    %v1272 = vunpack.c.h.b16 %v665
    %v1273 = vunpack.c.l.b16 %v666
    %v1274 = vunpack.c.h.b16 %v666
    %v1275 = vunpack.c.l.b16 %v667
    %v1276 = vunpack.c.h.b16 %v667
    %v1277 = vunpack.c.l.b16 %v668
    %v1278 = vunpack.c.h.b16 %v668
    %v1279 = vunpack.c.l.b16 %v669
    %v1280 = vunpack.c.h.b16 %v669
    %v1281 = vunpack.c.l.b16 %v670
    %v1282 = vunpack.c.h.b16 %v670
    %v1283 = vunpack.c.l.b16 %v671
    %v1284 = vunpack.c.h.b16 %v671
    %v1285 = vunpack.c.l.b16 %v672
    %v1286 = vunpack.c.h.b16 %v672
    %v1287 = vunpack.c.l.b16 %v673
    %v1288 = vunpack.c.h.b16 %v673
    %v1289 = vunpack.c.l.b16 %v674
    %v1290 = vunpack.c.h.b16 %v674
    %v1291 = vunpack.c.l.b16 %v675
    %v1292 = vunpack.c.h.b16 %v675
    %v1293 = vunpack.c.l.b16 %v676
    %v1294 = vunpack.c.h.b16 %v676
    %v1295 = vunpack.c.l.b16 %v677
    %v1296 = vunpack.c.h.b16 %v677
    %v1297 = vunpack.c.l.b16 %v678
    %v1298 = vunpack.c.h.b16 %v678
    %v1299 = vunpack.c.l.b16 %v679
    %v1300 = vunpack.c.h.b16 %v679
    %v1301 = vunpack.c.l.b16 %v680
    %v1302 = vunpack.c.h.b16 %v680
    %v1303 = vunpack.c.l.b16 %v681
    %v1304 = vunpack.c.h.b16 %v681
    %v1305 = vunpack.c.l.b16 %v682
    %v1306 = vunpack.c.h.b16 %v682
    %v1307 = vunpack.c.l.b16 %v683
    %v1308 = vunpack.c.h.b16 %v683
    %v1309 = vunpack.c.l.b16 %v684
    %v1310 = vunpack.c.h.b16 %v684
    %v1311 = vunpack.c.l.b16 %v685
    %v1312 = vunpack.c.h.b16 %v685
    %v1313 = vunpack.c.l.b16 %v686
    %v1314 = vunpack.c.h.b16 %v686
    %v1315 = vunpack.c.l.b16 %v687
    %v1316 = vunpack.c.h.b16 %v687
    %v1317 = vunpack.c.l.b16 %v688
    %v1318 = vunpack.c.h.b16 %v688
    %v1319 = vunpack.c.l.b16 %v689
    %v1320 = vunpack.c.h.b16 %v689
    %v1321 = vunpack.c.l.b16 %v690
    %v1322 = vunpack.c.h.b16 %v690
    %v1323 = vunpack.c.l.b16 %v691
    %v1324 = vunpack.c.h.b16 %v691
    %v1325 = vunpack.c.l.b16 %v692
    %v1326 = vunpack.c.h.b16 %v692
    %v1327 = vunpack.c.l.b16 %v693
    %v1328 = vunpack.c.h.b16 %v693
    %v1329 = vunpack.c.l.b16 %v694
    %v1330 = vunpack.c.h.b16 %v694
    %v1331 = vunpack.c.l.b16 %v695
    %v1332 = vunpack.c.h.b16 %v695
    %v1333 = vunpack.c.l.b16 %v696
    %v1334 = vunpack.c.h.b16 %v696
    %v1335 = vunpack.c.l.b16 %v697
    %v1336 = vunpack.c.h.b16 %v697
    %v1337 = vunpack.c.l.b16 %v698
    %v1338 = vunpack.c.h.b16 %v698
    %v1339 = vunpack.c.l.b16 %v699
    %v1340 = vunpack.c.h.b16 %v699
    %v1341 = vunpack.c.l.b16 %v700
    %v1342 = vunpack.c.h.b16 %v700
    %v1343 = vunpack.c.l.b16 %v701
    %v1344 = vunpack.c.h.b16 %v701
    %v1345 = vunpack.c.l.b16 %v702
    %v1346 = vunpack.c.h.b16 %v702
    %v1347 = vunpack.c.l.b16 %v703
    %v1348 = vunpack.c.h.b16 %v703
    %v1349 = vunpack.c.l.b16 %v704
    %v1350 = vunpack.c.h.b16 %v704
    %v1351 = vunpack.c.l.b16 %v705
    %v1352 = vunpack.c.h.b16 %v705
    %v1353 = vunpack.c.l.b16 %v706
    %v1354 = vunpack.c.h.b16 %v706
    %v1355 = vunpack.c.l.b16 %v707
    %v1356 = vunpack.c.h.b16 %v707
    %v1357 = vunpack.c.l.b16 %v708
    %v1358 = vunpack.c.h.b16 %v708
    %v1359 = vunpack.c.l.b16 %v709
    %v1360 = vunpack.c.h.b16 %v709
    %v1361 = vunpack.c.l.b16 %v710
    %v1362 = vunpack.c.h.b16 %v710
    %v1363 = vunpack.c.l.b16 %v711
    %v1364 = vunpack.c.h.b16 %v711
    %v1365 = vunpack.c.l.b16 %v712
    %v1366 = vunpack.c.h.b16 %v712
    %v1367 = vunpack.c.l.b16 %v713
    %v1368 = vunpack.c.h.b16 %v713
    %v1369 = vunpack.c.l.b16 %v714
    %v1370 = vunpack.c.h.b16 %v714
    %v1371 = vunpack.c.l.b16 %v715
    %v1372 = vunpack.c.h.b16 %v715
    %v1373 = vunpack.c.l.b16 %v716
    %v1374 = vunpack.c.h.b16 %v716
    %v1375 = vunpack.c.l.b16 %v717
    %v1376 = vunpack.c.h.b16 %v717
    %v1377 = vunpack.c.l.b16 %v718
    %v1378 = vunpack.c.h.b16 %v718
    %v1379 = vunpack.c.l.b16 %v719
    %v1380 = vunpack.c.h.b16 %v719
    %v1381 = vunpack.c.l.b16 %v720
    %v1382 = vunpack.c.h.b16 %v720
    %v1383 = vunpack.c.l.b16 %v721
    %v1384 = vunpack.c.h.b16 %v721
    %v1385 = vunpack.c.l.b16 %v722
    %v1386 = vunpack.c.h.b16 %v722
    %v1387 = vunpack.c.l.b16 %v723
    %v1388 = vunpack.c.h.b16 %v723
    %v1389 = vunpack.c.l.b16 %v724
    %v1390 = vunpack.c.h.b16 %v724
    %v1391 = vunpack.c.l.b16 %v725
    %v1392 = vunpack.c.h.b16 %v725
    %v1393 = vunpack.c.l.b16 %v726
    %v1394 = vunpack.c.h.b16 %v726
    %v1395 = vunpack.c.l.b16 %v727
    %v1396 = vunpack.c.h.b16 %v727
    %v1397 = vunpack.c.l.b16 %v728
    %v1398 = vunpack.c.h.b16 %v728
    %v1399 = vunpack.c.l.b16 %v729
    %v1400 = vunpack.c.h.b16 %v729
    %v1401 = vunpack.c.l.b16 %v730
    %v1402 = vunpack.c.h.b16 %v730
    %v1403 = vunpack.c.l.b16 %v731
    %v1404 = vunpack.c.h.b16 %v731
    %v1405 = vunpack.c.l.b16 %v732
    %v1406 = vunpack.c.h.b16 %v732
    %v1407 = vunpack.c.l.b16 %v733
    %v1408 = vunpack.c.h.b16 %v733
    %v1409 = vunpack.c.l.b16 %v734
    %v1410 = vunpack.c.h.b16 %v734
    %v1411 = vunpack.c.l.b16 %v735
    %v1412 = vunpack.c.h.b16 %v735
    %v1413 = vunpack.c.l.b16 %v736
    %v1414 = vunpack.c.h.b16 %v736
    %v1415 = vunpack.c.l.b16 %v737
    %v1416 = vunpack.c.h.b16 %v737
    %v1417 = vunpack.c.l.b16 %v738
    %v1418 = vunpack.c.h.b16 %v738
    %v1419 = vunpack.c.l.b16 %v739
    %v1420 = vunpack.c.h.b16 %v739
    %v1421 = vunpack.c.l.b16 %v740
    %v1422 = vunpack.c.h.b16 %v740
    %v1423 = vunpack.c.l.b16 %v741
    %v1424 = vunpack.c.h.b16 %v741
    %v1425 = vunpack.c.l.b16 %v742
    %v1426 = vunpack.c.h.b16 %v742
    %v1427 = vunpack.c.l.b16 %v743
    %v1428 = vunpack.c.h.b16 %v743
    %v1429 = vunpack.c.l.b16 %v744
    %v1430 = vunpack.c.h.b16 %v744
    %v1431 = vunpack.c.l.b16 %v745
    %v1432 = vunpack.c.h.b16 %v745
    %v1433 = vunpack.c.l.b16 %v746
    %v1434 = vunpack.c.h.b16 %v746
    %v1435 = vunpack.c.l.b16 %v747
    %v1436 = vunpack.c.h.b16 %v747
    %v1437 = vunpack.c.l.b16 %v748
    %v1438 = vunpack.c.h.b16 %v748
    %v1439 = vunpack.c.l.b16 %v749
    %v1440 = vunpack.c.h.b16 %v749
    %v1441 = vunpack.c.l.b16 %v750
    %v1442 = vunpack.c.h.b16 %v750
    %v1443 = vunpack.c.l.b16 %v751
    %v1444 = vunpack.c.h.b16 %v751
    %v1445 = vunpack.c.l.b16 %v752
    %v1446 = vunpack.c.h.b16 %v752
    %v1447 = vpack.c.b16 %v1003, %v999
    %v1448 = vpack.c.b16 %v1004, %v1000
    %v1449 = vpack.c.b16 %v1005, %v1001
    %v1450 = vpack.c.b16 %v1006, %v1002
    %v1451 = vpack.c.b16 %v1011, %v1007
    %v1452 = vpack.c.b16 %v1012, %v1008
    %v1453 = vpack.c.b16 %v1013, %v1009
    %v1454 = vpack.c.b16 %v1014, %v1010
    %v1455 = vpack.c.b16 %v1019, %v1015
    %v1456 = vpack.c.b16 %v1020, %v1016
    %v1457 = vpack.c.b16 %v1021, %v1017
    %v1458 = vpack.c.b16 %v1022, %v1018
    %v1459 = vpack.c.b16 %v1027, %v1023
    %v1460 = vpack.c.b16 %v1028, %v1024
    %v1461 = vpack.c.b16 %v1029, %v1025
    %v1462 = vpack.c.b16 %v1030, %v1026
    %v1463 = vpack.c.b16 %v1035, %v1031
    %v1464 = vpack.c.b16 %v1036, %v1032
    %v1465 = vpack.c.b16 %v1037, %v1033
    %v1466 = vpack.c.b16 %v1038, %v1034
    %v1467 = vpack.c.b16 %v1043, %v1039
    %v1468 = vpack.c.b16 %v1044, %v1040
    %v1469 = vpack.c.b16 %v1045, %v1041
    %v1470 = vpack.c.b16 %v1046, %v1042
    %v1471 = vpack.c.b16 %v1051, %v1047
    %v1472 = vpack.c.b16 %v1052, %v1048
    %v1473 = vpack.c.b16 %v1053, %v1049
    %v1474 = vpack.c.b16 %v1054, %v1050
    %v1475 = vpack.c.b16 %v1059, %v1055
    %v1476 = vpack.c.b16 %v1060, %v1056
    %v1477 = vpack.c.b16 %v1061, %v1057
    %v1478 = vpack.c.b16 %v1062, %v1058
    %v1479 = vpack.c.b16 %v1067, %v1063
    %v1480 = vpack.c.b16 %v1068, %v1064
    %v1481 = vpack.c.b16 %v1069, %v1065
    %v1482 = vpack.c.b16 %v1070, %v1066
    %v1483 = vpack.c.b16 %v1075, %v1071
    %v1484 = vpack.c.b16 %v1076, %v1072
    %v1485 = vpack.c.b16 %v1077, %v1073
    %v1486 = vpack.c.b16 %v1078, %v1074
    %v1487 = vpack.c.b16 %v1083, %v1079
    %v1488 = vpack.c.b16 %v1084, %v1080
    %v1489 = vpack.c.b16 %v1085, %v1081
    %v1490 = vpack.c.b16 %v1086, %v1082
    %v1491 = vpack.c.b16 %v1091, %v1087
    %v1492 = vpack.c.b16 %v1092, %v1088
    %v1493 = vpack.c.b16 %v1093, %v1089
    %v1494 = vpack.c.b16 %v1094, %v1090
    %v1495 = vpack.c.b16 %v1099, %v1095
    %v1496 = vpack.c.b16 %v1100, %v1096
    %v1497 = vpack.c.b16 %v1101, %v1097
    %v1498 = vpack.c.b16 %v1102, %v1098
    %v1499 = vpack.c.b16 %v1107, %v1103
    %v1500 = vpack.c.b16 %v1108, %v1104
    %v1501 = vpack.c.b16 %v1109, %v1105
    %v1502 = vpack.c.b16 %v1110, %v1106
    %v1503 = vpack.c.b16 %v1115, %v1111
    %v1504 = vpack.c.b16 %v1116, %v1112
    %v1505 = vpack.c.b16 %v1117, %v1113
    %v1506 = vpack.c.b16 %v1118, %v1114
    %v1507 = vpack.c.b16 %v1123, %v1119
    %v1508 = vpack.c.b16 %v1124, %v1120
    %v1509 = vpack.c.b16 %v1125, %v1121
    %v1510 = vpack.c.b16 %v1126, %v1122
    %v1511 = vpack.c.b16 %v1131, %v1127
    %v1512 = vpack.c.b16 %v1132, %v1128
    %v1513 = vpack.c.b16 %v1133, %v1129
    %v1514 = vpack.c.b16 %v1134, %v1130
    %v1515 = vpack.c.b16 %v1139, %v1135
    %v1516 = vpack.c.b16 %v1140, %v1136
    %v1517 = vpack.c.b16 %v1141, %v1137
    %v1518 = vpack.c.b16 %v1142, %v1138
    %v1519 = vpack.c.b16 %v1147, %v1143
    %v1520 = vpack.c.b16 %v1148, %v1144
    %v1521 = vpack.c.b16 %v1149, %v1145
    %v1522 = vpack.c.b16 %v1150, %v1146
    %v1523 = vpack.c.b16 %v1155, %v1151
    %v1524 = vpack.c.b16 %v1156, %v1152
    %v1525 = vpack.c.b16 %v1157, %v1153
    %v1526 = vpack.c.b16 %v1158, %v1154
    %v1527 = vpack.c.b16 %v1163, %v1159
    %v1528 = vpack.c.b16 %v1164, %v1160
    %v1529 = vpack.c.b16 %v1165, %v1161
    %v1530 = vpack.c.b16 %v1166, %v1162
    %v1531 = vpack.c.b16 %v1171, %v1167
    %v1532 = vpack.c.b16 %v1172, %v1168
    %v1533 = vpack.c.b16 %v1173, %v1169
    %v1534 = vpack.c.b16 %v1174, %v1170
    %v1535 = vpack.c.b16 %v1179, %v1175
    %v1536 = vpack.c.b16 %v1180, %v1176
    %v1537 = vpack.c.b16 %v1181, %v1177
    %v1538 = vpack.c.b16 %v1182, %v1178
    %v1539 = vpack.c.b16 %v1187, %v1183
    %v1540 = vpack.c.b16 %v1188, %v1184
    %v1541 = vpack.c.b16 %v1189, %v1185
    %v1542 = vpack.c.b16 %v1190, %v1186
    %v1543 = vpack.c.b16 %v1195, %v1191
    %v1544 = vpack.c.b16 %v1196, %v1192
    %v1545 = vpack.c.b16 %v1197, %v1193
    %v1546 = vpack.c.b16 %v1198, %v1194
    %v1547 = vpack.c.b16 %v1203, %v1199
    %v1548 = vpack.c.b16 %v1204, %v1200
    %v1549 = vpack.c.b16 %v1205, %v1201
    %v1550 = vpack.c.b16 %v1206, %v1202
    %v1551 = vpack.c.b16 %v1211, %v1207
    %v1552 = vpack.c.b16 %v1212, %v1208
    %v1553 = vpack.c.b16 %v1213, %v1209
    %v1554 = vpack.c.b16 %v1214, %v1210
    %v1555 = vpack.c.b16 %v1219, %v1215
    %v1556 = vpack.c.b16 %v1220, %v1216
    %v1557 = vpack.c.b16 %v1221, %v1217
    %v1558 = vpack.c.b16 %v1222, %v1218
    %v1559 = vpack.c.b16 %v1227, %v1223
    %v1560 = vpack.c.b16 %v1228, %v1224
    %v1561 = vpack.c.b16 %v1229, %v1225
    %v1562 = vpack.c.b16 %v1230, %v1226
    %v1563 = vpack.c.b16 %v1235, %v1231
    %v1564 = vpack.c.b16 %v1236, %v1232
    %v1565 = vpack.c.b16 %v1237, %v1233
    %v1566 = vpack.c.b16 %v1238, %v1234
    %v1567 = vpack.c.b16 %v1243, %v1239
    %v1568 = vpack.c.b16 %v1244, %v1240
    %v1569 = vpack.c.b16 %v1245, %v1241
    %v1570 = vpack.c.b16 %v1246, %v1242
    %v1571 = vpack.c.b16 %v1251, %v1247
    %v1572 = vpack.c.b16 %v1252, %v1248
    %v1573 = vpack.c.b16 %v1253, %v1249
    %v1574 = vpack.c.b16 %v1254, %v1250
    %v1575 = vpack.c.b16 %v1259, %v1255
    %v1576 = vpack.c.b16 %v1260, %v1256
    %v1577 = vpack.c.b16 %v1261, %v1257
    %v1578 = vpack.c.b16 %v1262, %v1258
    %v1579 = vpack.c.b16 %v1267, %v1263
    %v1580 = vpack.c.b16 %v1268, %v1264
    %v1581 = vpack.c.b16 %v1269, %v1265
    %v1582 = vpack.c.b16 %v1270, %v1266
    %v1583 = vpack.c.b16 %v1275, %v1271
    %v1584 = vpack.c.b16 %v1276, %v1272
    %v1585 = vpack.c.b16 %v1277, %v1273
    %v1586 = vpack.c.b16 %v1278, %v1274
    %v1587 = vpack.c.b16 %v1283, %v1279
    %v1588 = vpack.c.b16 %v1284, %v1280
    %v1589 = vpack.c.b16 %v1285, %v1281
    %v1590 = vpack.c.b16 %v1286, %v1282
    %v1591 = vpack.c.b16 %v1291, %v1287
    %v1592 = vpack.c.b16 %v1292, %v1288
    %v1593 = vpack.c.b16 %v1293, %v1289
    %v1594 = vpack.c.b16 %v1294, %v1290
    %v1595 = vpack.c.b16 %v1299, %v1295
    %v1596 = vpack.c.b16 %v1300, %v1296
    %v1597 = vpack.c.b16 %v1301, %v1297
    %v1598 = vpack.c.b16 %v1302, %v1298
    %v1599 = vpack.c.b16 %v1307, %v1303
    %v1600 = vpack.c.b16 %v1308, %v1304
    %v1601 = vpack.c.b16 %v1309, %v1305
    %v1602 = vpack.c.b16 %v1310, %v1306
    %v1603 = vpack.c.b16 %v1315, %v1311
    %v1604 = vpack.c.b16 %v1316, %v1312
    %v1605 = vpack.c.b16 %v1317, %v1313
    %v1606 = vpack.c.b16 %v1318, %v1314
    %v1607 = vpack.c.b16 %v1323, %v1319
    %v1608 = vpack.c.b16 %v1324, %v1320
    %v1609 = vpack.c.b16 %v1325, %v1321
    %v1610 = vpack.c.b16 %v1326, %v1322
    %v1611 = vpack.c.b16 %v1331, %v1327
    %v1612 = vpack.c.b16 %v1332, %v1328
    %v1613 = vpack.c.b16 %v1333, %v1329
    %v1614 = vpack.c.b16 %v1334, %v1330
    %v1615 = vpack.c.b16 %v1339, %v1335
    %v1616 = vpack.c.b16 %v1340, %v1336
    %v1617 = vpack.c.b16 %v1341, %v1337
    %v1618 = vpack.c.b16 %v1342, %v1338
    %v1619 = vpack.c.b16 %v1347, %v1343
    %v1620 = vpack.c.b16 %v1348, %v1344
    %v1621 = vpack.c.b16 %v1349, %v1345
    %v1622 = vpack.c.b16 %v1350, %v1346
    %v1623 = vpack.c.b16 %v1355, %v1351
    %v1624 = vpack.c.b16 %v1356, %v1352
    %v1625 = vpack.c.b16 %v1357, %v1353
    %v1626 = vpack.c.b16 %v1358, %v1354
    %v1627 = vpack.c.b16 %v1363, %v1359
    %v1628 = vpack.c.b16 %v1364, %v1360
    %v1629 = vpack.c.b16 %v1365, %v1361
    %v1630 = vpack.c.b16 %v1366, %v1362
    %v1631 = vpack.c.b16 %v1371, %v1367
    %v1632 = vpack.c.b16 %v1372, %v1368
    %v1633 = vpack.c.b16 %v1373, %v1369
    %v1634 = vpack.c.b16 %v1374, %v1370
    %v1635 = vpack.c.b16 %v1379, %v1375
    %v1636 = vpack.c.b16 %v1380, %v1376
    %v1637 = vpack.c.b16 %v1381, %v1377
    %v1638 = vpack.c.b16 %v1382, %v1378
    %v1639 = vpack.c.b16 %v1387, %v1383
    %v1640 = vpack.c.b16 %v1388, %v1384
    %v1641 = vpack.c.b16 %v1389, %v1385
    %v1642 = vpack.c.b16 %v1390, %v1386
    %v1643 = vpack.c.b16 %v1395, %v1391
    %v1644 = vpack.c.b16 %v1396, %v1392
    %v1645 = vpack.c.b16 %v1397, %v1393
    %v1646 = vpack.c.b16 %v1398, %v1394
    %v1647 = vpack.c.b16 %v1403, %v1399
    %v1648 = vpack.c.b16 %v1404, %v1400
    %v1649 = vpack.c.b16 %v1405, %v1401
    %v1650 = vpack.c.b16 %v1406, %v1402
    %v1651 = vpack.c.b16 %v1411, %v1407
    %v1652 = vpack.c.b16 %v1412, %v1408
    %v1653 = vpack.c.b16 %v1413, %v1409
    %v1654 = vpack.c.b16 %v1414, %v1410
    %v1655 = vpack.c.b16 %v1419, %v1415
    %v1656 = vpack.c.b16 %v1420, %v1416
    %v1657 = vpack.c.b16 %v1421, %v1417
    %v1658 = vpack.c.b16 %v1422, %v1418
    %v1659 = vpack.c.b16 %v1427, %v1423
    %v1660 = vpack.c.b16 %v1428, %v1424
    %v1661 = vpack.c.b16 %v1429, %v1425
    %v1662 = vpack.c.b16 %v1430, %v1426
    %v1663 = vpack.c.b16 %v1435, %v1431
    %v1664 = vpack.c.b16 %v1436, %v1432
    %v1665 = vpack.c.b16 %v1437, %v1433
    %v1666 = vpack.c.b16 %v1438, %v1434
    %v1667 = vpack.c.b16 %v1443, %v1439
    %v1668 = vpack.c.b16 %v1444, %v1440
    %v1669 = vpack.c.b16 %v1445, %v1441
    %v1670 = vpack.c.b16 %v1446, %v1442
    %1895 = vmatprep.subr.bf16.mxu0 %v1476
    %1896 = vmatpush1.bf16.msra.mxu0 %v1475
    %1897 = vmatprep.subr.bf16.mxu0 %v1472
    %1898 = vmatpush1.bf16.msra.mxu0 %v1471
    %1899 = vmatprep.subr.bf16.mxu0 %v1468
    %1900 = vmatpush1.bf16.msra.mxu0 %v1467
    %1901 = vmatprep.subr.bf16.mxu0 %v1464
    %1902 = vmatpush1.bf16.msra.mxu0 %v1463
    %1903 = vmatprep.subr.bf16.mxu0 %v1460
    %1904 = vmatpush1.bf16.msra.mxu0 %v1459
    %1905 = vmatprep.subr.bf16.mxu0 %v1456
    %1906 = vmatpush1.bf16.msra.mxu0 %v1455
    %1907 = vmatprep.subr.bf16.mxu0 %v1452
    %1908 = vmatpush1.bf16.msra.mxu0 %v1451
    %1909 = vmatprep.subr.bf16.mxu0 %v1448
    %1910 = vmatpush1.bf16.msra.mxu0 %v1447
    %1911 = vmatprep.subr.bf16.mxu0 %v1508
    %1912 = vmatpush2.bf16.msra.mxu0 %v1507
    %1913 = vmatprep.subr.bf16.mxu0 %v1504
    %1914 = vmatpush2.bf16.msra.mxu0 %v1503
    %1915 = vmatprep.subr.bf16.mxu0 %v1500
    %1916 = vmatpush2.bf16.msra.mxu0 %v1499
    %1917 = vmatprep.subr.bf16.mxu0 %v1496
    %1918 = vmatpush2.bf16.msra.mxu0 %v1495
    %1919 = vmatprep.subr.bf16.mxu0 %v1492
    %1920 = vmatpush2.bf16.msra.mxu0 %v1491
    %1921 = vmatprep.subr.bf16.mxu0 %v1488
    %1922 = vmatpush2.bf16.msra.mxu0 %v1487
    %1923 = vmatprep.subr.bf16.mxu0 %v1484
    %1924 = vmatpush2.bf16.msra.mxu0 %v1483
    %1925 = vmatprep.subr.bf16.mxu0 %v1480
    %1926 = vmatpush2.bf16.msra.mxu0 %v1479
    %1927 = vmatprep.mubr.bf16.mxu0 %v523
    %1928 = vmatmul.mubr.bf16.gmra.mxu0 %v522
    %v1929 = vpop.f32.mrf.mxu0
    %v1930 = vadd.f32 %v758, %v1929
    %v1931 = vpop.f32.mrf.mxu0
    %v1932 = vadd.f32 %v762, %v1931
    %v1933 = vpop.f32.mrf.mxu0
    %v1934 = vadd.f32 %v758, %v1933
    %v1935 = vpop.f32.mrf.mxu0
    %v1936 = vadd.f32 %v762, %v1935
    %1937 = vdwg.mxu0
    %1938 = vmatprep.subr.bf16.mxu0 %v1540
    %1939 = vmatpush1.bf16.msra.mxu0 %v1539
    %1940 = vmatprep.subr.bf16.mxu0 %v1536
    %1941 = vmatpush1.bf16.msra.mxu0 %v1535
    %1942 = vmatprep.subr.bf16.mxu0 %v1532
    %1943 = vmatpush1.bf16.msra.mxu0 %v1531
    %1944 = vmatprep.subr.bf16.mxu0 %v1528
    %1945 = vmatpush1.bf16.msra.mxu0 %v1527
    %1946 = vmatprep.subr.bf16.mxu0 %v1524
    %1947 = vmatpush1.bf16.msra.mxu0 %v1523
    %1948 = vmatprep.subr.bf16.mxu0 %v1520
    %1949 = vmatpush1.bf16.msra.mxu0 %v1519
    %1950 = vmatprep.subr.bf16.mxu0 %v1516
    %1951 = vmatpush1.bf16.msra.mxu0 %v1515
    %1952 = vmatprep.subr.bf16.mxu0 %v1512
    %1953 = vmatpush1.bf16.msra.mxu0 %v1511
    %1954 = vmatprep.subr.bf16.mxu0 %v1572
    %1955 = vmatpush2.bf16.msra.mxu0 %v1571
    %1956 = vmatprep.subr.bf16.mxu0 %v1568
    %1957 = vmatpush2.bf16.msra.mxu0 %v1567
    %1958 = vmatprep.subr.bf16.mxu0 %v1564
    %1959 = vmatpush2.bf16.msra.mxu0 %v1563
    %1960 = vmatprep.subr.bf16.mxu0 %v1560
    %1961 = vmatpush2.bf16.msra.mxu0 %v1559
    %1962 = vmatprep.subr.bf16.mxu0 %v1556
    %1963 = vmatpush2.bf16.msra.mxu0 %v1555
    %1964 = vmatprep.subr.bf16.mxu0 %v1552
    %1965 = vmatpush2.bf16.msra.mxu0 %v1551
    %1966 = vmatprep.subr.bf16.mxu0 %v1548
    %1967 = vmatpush2.bf16.msra.mxu0 %v1547
    %1968 = vmatprep.subr.bf16.mxu0 %v1544
    %1969 = vmatpush2.bf16.msra.mxu0 %v1543
    %1970 = vmatprep.mubr.bf16.mxu0 %v525
    %1971 = vmatmul.mubr.bf16.gmra.mxu0 %v524
    %v1972 = vpop.f32.mrf.mxu0
    %v1973 = vadd.f32 %v1930, %v1972
    %v1974 = vpop.f32.mrf.mxu0
    %v1975 = vadd.f32 %v1932, %v1974
    %v1976 = vpop.f32.mrf.mxu0
    %v1977 = vadd.f32 %v1934, %v1976
    %v1978 = vpop.f32.mrf.mxu0
    %v1979 = vadd.f32 %v1936, %v1978
    %1980 = vdwg.mxu0
    %1981 = vmatprep.subr.bf16.mxu0 %v1604
    %1982 = vmatpush1.bf16.msra.mxu0 %v1603
    %1983 = vmatprep.subr.bf16.mxu0 %v1600
    %1984 = vmatpush1.bf16.msra.mxu0 %v1599
    %1985 = vmatprep.subr.bf16.mxu0 %v1596
    %1986 = vmatpush1.bf16.msra.mxu0 %v1595
    %1987 = vmatprep.subr.bf16.mxu0 %v1592
    %1988 = vmatpush1.bf16.msra.mxu0 %v1591
    %1989 = vmatprep.subr.bf16.mxu0 %v1588
    %1990 = vmatpush1.bf16.msra.mxu0 %v1587
    %1991 = vmatprep.subr.bf16.mxu0 %v1584
    %1992 = vmatpush1.bf16.msra.mxu0 %v1583
    %1993 = vmatprep.subr.bf16.mxu0 %v1580
    %1994 = vmatpush1.bf16.msra.mxu0 %v1579
    %1995 = vmatprep.subr.bf16.mxu0 %v1576
    %1996 = vmatpush1.bf16.msra.mxu0 %v1575
    %1997 = vmatprep.subr.bf16.mxu0 %v1636
    %1998 = vmatpush2.bf16.msra.mxu0 %v1635
    %1999 = vmatprep.subr.bf16.mxu0 %v1632
    %2000 = vmatpush2.bf16.msra.mxu0 %v1631
    %2001 = vmatprep.subr.bf16.mxu0 %v1628
    %2002 = vmatpush2.bf16.msra.mxu0 %v1627
    %2003 = vmatprep.subr.bf16.mxu0 %v1624
    %2004 = vmatpush2.bf16.msra.mxu0 %v1623
    %2005 = vmatprep.subr.bf16.mxu0 %v1620
    %2006 = vmatpush2.bf16.msra.mxu0 %v1619
    %2007 = vmatprep.subr.bf16.mxu0 %v1616
    %2008 = vmatpush2.bf16.msra.mxu0 %v1615
    %2009 = vmatprep.subr.bf16.mxu0 %v1612
    %2010 = vmatpush2.bf16.msra.mxu0 %v1611
    %2011 = vmatprep.subr.bf16.mxu0 %v1608
    %2012 = vmatpush2.bf16.msra.mxu0 %v1607
    %2013 = vmatprep.mubr.bf16.mxu0 %v527
    %2014 = vmatmul.mubr.bf16.gmra.mxu0 %v526
    %v2015 = vpop.f32.mrf.mxu0
    %v2016 = vadd.f32 %v1973, %v2015
    %v2017 = vpop.f32.mrf.mxu0
    %v2018 = vadd.f32 %v1975, %v2017
    %v2019 = vpop.f32.mrf.mxu0
    %v2020 = vadd.f32 %v1977, %v2019
    %v2021 = vpop.f32.mrf.mxu0
    %v2022 = vadd.f32 %v1979, %v2021
    %2023 = vdwg.mxu0
    %2024 = vmatprep.subr.bf16.mxu0 %v1668
    %2025 = vmatpush1.bf16.msra.mxu0 %v1667
    %2026 = vmatprep.subr.bf16.mxu0 %v1664
    %2027 = vmatpush1.bf16.msra.mxu0 %v1663
    %2028 = vmatprep.subr.bf16.mxu0 %v1660
    %2029 = vmatpush1.bf16.msra.mxu0 %v1659
    %2030 = vmatprep.subr.bf16.mxu0 %v1656
    %2031 = vmatpush1.bf16.msra.mxu0 %v1655
    %2032 = vmatprep.subr.bf16.mxu0 %v1652
    %2033 = vmatpush1.bf16.msra.mxu0 %v1651
    %2034 = vmatprep.subr.bf16.mxu0 %v1648
    %2035 = vmatpush1.bf16.msra.mxu0 %v1647
    %2036 = vmatprep.subr.bf16.mxu0 %v1644
    %2037 = vmatpush1.bf16.msra.mxu0 %v1643
    %2038 = vmatprep.subr.bf16.mxu0 %v1640
    %2039 = vmatpush1.bf16.msra.mxu0 %v1639
    %2040 = vmatprep.subr.bf16.mxu0 0
    %2041 = vmatpush2.bf16.msra.mxu0 0
    %2042 = vmatprep.subr.bf16.mxu0 0
    %2043 = vmatpush2.bf16.msra.mxu0 0
    %2044 = vmatprep.subr.bf16.mxu0 0
    %2045 = vmatpush2.bf16.msra.mxu0 0
    %2046 = vmatprep.subr.bf16.mxu0 0
    %2047 = vmatpush2.bf16.msra.mxu0 0
    %2048 = vmatprep.subr.bf16.mxu0 0
    %2049 = vmatpush2.bf16.msra.mxu0 0
    %2050 = vmatprep.subr.bf16.mxu0 0
    %2051 = vmatpush2.bf16.msra.mxu0 0
    %2052 = vmatprep.subr.bf16.mxu0 0
    %2053 = vmatpush2.bf16.msra.mxu0 0
    %2054 = vmatprep.subr.bf16.mxu0 0
    %2055 = vmatpush2.bf16.msra.mxu0 0
    %2056 = vmatprep.mubr.bf16.mxu0 0
    %2057 = vmatmul.mubr.bf16.gmra.mxu0 %v528
    %v2058 = vpop.f32.mrf.mxu0
    %v2059 = vadd.f32 %v2016, %v2058
    %v2060 = vpop.f32.mrf.mxu0
    %v2061 = vadd.f32 %v2018, %v2060
    %v2062 = vpop.f32.mrf.mxu0
    %v2063 = vadd.f32 %v2020, %v2062
    %v2064 = vpop.f32.mrf.mxu0
    %v2065 = vadd.f32 %v2022, %v2064
    %2066 = vdwg.mxu0
    %2067 = vmatprep.subr.bf16.mxu0 %v1478
    %2068 = vmatpush1.bf16.msra.mxu0 %v1477
    %2069 = vmatprep.subr.bf16.mxu0 %v1474
    %2070 = vmatpush1.bf16.msra.mxu0 %v1473
    %2071 = vmatprep.subr.bf16.mxu0 %v1470
    %2072 = vmatpush1.bf16.msra.mxu0 %v1469
    %2073 = vmatprep.subr.bf16.mxu0 %v1466
    %2074 = vmatpush1.bf16.msra.mxu0 %v1465
    %2075 = vmatprep.subr.bf16.mxu0 %v1462
    %2076 = vmatpush1.bf16.msra.mxu0 %v1461
    %2077 = vmatprep.subr.bf16.mxu0 %v1458
    %2078 = vmatpush1.bf16.msra.mxu0 %v1457
    %2079 = vmatprep.subr.bf16.mxu0 %v1454
    %2080 = vmatpush1.bf16.msra.mxu0 %v1453
    %2081 = vmatprep.subr.bf16.mxu0 %v1450
    %2082 = vmatpush1.bf16.msra.mxu0 %v1449
    %2083 = vmatprep.subr.bf16.mxu0 %v1510
    %2084 = vmatpush2.bf16.msra.mxu0 %v1509
    %2085 = vmatprep.subr.bf16.mxu0 %v1506
    %2086 = vmatpush2.bf16.msra.mxu0 %v1505
    %2087 = vmatprep.subr.bf16.mxu0 %v1502
    %2088 = vmatpush2.bf16.msra.mxu0 %v1501
    %2089 = vmatprep.subr.bf16.mxu0 %v1498
    %2090 = vmatpush2.bf16.msra.mxu0 %v1497
    %2091 = vmatprep.subr.bf16.mxu0 %v1494
    %2092 = vmatpush2.bf16.msra.mxu0 %v1493
    %2093 = vmatprep.subr.bf16.mxu0 %v1490
    %2094 = vmatpush2.bf16.msra.mxu0 %v1489
    %2095 = vmatprep.subr.bf16.mxu0 %v1486
    %2096 = vmatpush2.bf16.msra.mxu0 %v1485
    %2097 = vmatprep.subr.bf16.mxu0 %v1482
    %2098 = vmatpush2.bf16.msra.mxu0 %v1481
    %2099 = vmatprep.mubr.bf16.mxu0 %v523
    %2100 = vmatmul.mubr.bf16.gmra.mxu0 %v522
    %v2101 = vpop.f32.mrf.mxu0
    %v2102 = vadd.f32 %v766, %v2101
    %v2103 = vpop.f32.mrf.mxu0
    %v2104 = vadd.f32 %v770, %v2103
    %v2105 = vpop.f32.mrf.mxu0
    %v2106 = vadd.f32 %v766, %v2105
    %v2107 = vpop.f32.mrf.mxu0
    %v2108 = vadd.f32 %v770, %v2107
    %2109 = vdwg.mxu0
    %2110 = vmatprep.subr.bf16.mxu0 %v1542
    %2111 = vmatpush1.bf16.msra.mxu0 %v1541
    %2112 = vmatprep.subr.bf16.mxu0 %v1538
    %2113 = vmatpush1.bf16.msra.mxu0 %v1537
    %2114 = vmatprep.subr.bf16.mxu0 %v1534
    %2115 = vmatpush1.bf16.msra.mxu0 %v1533
    %2116 = vmatprep.subr.bf16.mxu0 %v1530
    %2117 = vmatpush1.bf16.msra.mxu0 %v1529
    %2118 = vmatprep.subr.bf16.mxu0 %v1526
    %2119 = vmatpush1.bf16.msra.mxu0 %v1525
    %2120 = vmatprep.subr.bf16.mxu0 %v1522
    %2121 = vmatpush1.bf16.msra.mxu0 %v1521
    %2122 = vmatprep.subr.bf16.mxu0 %v1518
    %2123 = vmatpush1.bf16.msra.mxu0 %v1517
    %2124 = vmatprep.subr.bf16.mxu0 %v1514
    %2125 = vmatpush1.bf16.msra.mxu0 %v1513
    %2126 = vmatprep.subr.bf16.mxu0 %v1574
    %2127 = vmatpush2.bf16.msra.mxu0 %v1573
    %2128 = vmatprep.subr.bf16.mxu0 %v1570
    %2129 = vmatpush2.bf16.msra.mxu0 %v1569
    %2130 = vmatprep.subr.bf16.mxu0 %v1566
    %2131 = vmatpush2.bf16.msra.mxu0 %v1565
    %2132 = vmatprep.subr.bf16.mxu0 %v1562
    %2133 = vmatpush2.bf16.msra.mxu0 %v1561
    %2134 = vmatprep.subr.bf16.mxu0 %v1558
    %2135 = vmatpush2.bf16.msra.mxu0 %v1557
    %2136 = vmatprep.subr.bf16.mxu0 %v1554
    %2137 = vmatpush2.bf16.msra.mxu0 %v1553
    %2138 = vmatprep.subr.bf16.mxu0 %v1550
    %2139 = vmatpush2.bf16.msra.mxu0 %v1549
    %2140 = vmatprep.subr.bf16.mxu0 %v1546
    %2141 = vmatpush2.bf16.msra.mxu0 %v1545
    %2142 = vmatprep.mubr.bf16.mxu0 %v525
    %2143 = vmatmul.mubr.bf16.gmra.mxu0 %v524
    %v2144 = vpop.f32.mrf.mxu0
    %v2145 = vadd.f32 %v2102, %v2144
    %v2146 = vpop.f32.mrf.mxu0
    %v2147 = vadd.f32 %v2104, %v2146
    %v2148 = vpop.f32.mrf.mxu0
    %v2149 = vadd.f32 %v2106, %v2148
    %v2150 = vpop.f32.mrf.mxu0
    %v2151 = vadd.f32 %v2108, %v2150
    %2152 = vdwg.mxu0
    %2153 = vmatprep.subr.bf16.mxu0 %v1606
    %2154 = vmatpush1.bf16.msra.mxu0 %v1605
    %2155 = vmatprep.subr.bf16.mxu0 %v1602
    %2156 = vmatpush1.bf16.msra.mxu0 %v1601
    %2157 = vmatprep.subr.bf16.mxu0 %v1598
    %2158 = vmatpush1.bf16.msra.mxu0 %v1597
    %2159 = vmatprep.subr.bf16.mxu0 %v1594
    %2160 = vmatpush1.bf16.msra.mxu0 %v1593
    %2161 = vmatprep.subr.bf16.mxu0 %v1590
    %2162 = vmatpush1.bf16.msra.mxu0 %v1589
    %2163 = vmatprep.subr.bf16.mxu0 %v1586
    %2164 = vmatpush1.bf16.msra.mxu0 %v1585
    %2165 = vmatprep.subr.bf16.mxu0 %v1582
    %2166 = vmatpush1.bf16.msra.mxu0 %v1581
    %2167 = vmatprep.subr.bf16.mxu0 %v1578
    %2168 = vmatpush1.bf16.msra.mxu0 %v1577
    %2169 = vmatprep.subr.bf16.mxu0 %v1638
    %2170 = vmatpush2.bf16.msra.mxu0 %v1637
    %2171 = vmatprep.subr.bf16.mxu0 %v1634
    %2172 = vmatpush2.bf16.msra.mxu0 %v1633
    %2173 = vmatprep.subr.bf16.mxu0 %v1630
    %2174 = vmatpush2.bf16.msra.mxu0 %v1629
    %2175 = vmatprep.subr.bf16.mxu0 %v1626
    %2176 = vmatpush2.bf16.msra.mxu0 %v1625
    %2177 = vmatprep.subr.bf16.mxu0 %v1622
    %2178 = vmatpush2.bf16.msra.mxu0 %v1621
    %2179 = vmatprep.subr.bf16.mxu0 %v1618
    %2180 = vmatpush2.bf16.msra.mxu0 %v1617
    %2181 = vmatprep.subr.bf16.mxu0 %v1614
    %2182 = vmatpush2.bf16.msra.mxu0 %v1613
    %2183 = vmatprep.subr.bf16.mxu0 %v1610
    %2184 = vmatpush2.bf16.msra.mxu0 %v1609
    %2185 = vmatprep.mubr.bf16.mxu0 %v527
    %2186 = vmatmul.mubr.bf16.gmra.mxu0 %v526
    %v2187 = vpop.f32.mrf.mxu0
    %v2188 = vadd.f32 %v2145, %v2187
    %v2189 = vpop.f32.mrf.mxu0
    %v2190 = vadd.f32 %v2147, %v2189
    %v2191 = vpop.f32.mrf.mxu0
    %v2192 = vadd.f32 %v2149, %v2191
    %v2193 = vpop.f32.mrf.mxu0
    %v2194 = vadd.f32 %v2151, %v2193
    %2195 = vdwg.mxu0
    %2196 = vmatprep.subr.bf16.mxu0 %v1670
    %2197 = vmatpush1.bf16.msra.mxu0 %v1669
    %2198 = vmatprep.subr.bf16.mxu0 %v1666
    %2199 = vmatpush1.bf16.msra.mxu0 %v1665
    %2200 = vmatprep.subr.bf16.mxu0 %v1662
    %2201 = vmatpush1.bf16.msra.mxu0 %v1661
    %2202 = vmatprep.subr.bf16.mxu0 %v1658
    %2203 = vmatpush1.bf16.msra.mxu0 %v1657
    %2204 = vmatprep.subr.bf16.mxu0 %v1654
    %2205 = vmatpush1.bf16.msra.mxu0 %v1653
    %2206 = vmatprep.subr.bf16.mxu0 %v1650
    %2207 = vmatpush1.bf16.msra.mxu0 %v1649
    %2208 = vmatprep.subr.bf16.mxu0 %v1646
    %2209 = vmatpush1.bf16.msra.mxu0 %v1645
    %2210 = vmatprep.subr.bf16.mxu0 %v1642
    %2211 = vmatpush1.bf16.msra.mxu0 %v1641
    %2212 = vmatprep.subr.bf16.mxu0 0
    %2213 = vmatpush2.bf16.msra.mxu0 0
    %2214 = vmatprep.subr.bf16.mxu0 0
    %2215 = vmatpush2.bf16.msra.mxu0 0
    %2216 = vmatprep.subr.bf16.mxu0 0
    %2217 = vmatpush2.bf16.msra.mxu0 0
    %2218 = vmatprep.subr.bf16.mxu0 0
    %2219 = vmatpush2.bf16.msra.mxu0 0
    %2220 = vmatprep.subr.bf16.mxu0 0
    %2221 = vmatpush2.bf16.msra.mxu0 0
    %2222 = vmatprep.subr.bf16.mxu0 0
    %2223 = vmatpush2.bf16.msra.mxu0 0
    %2224 = vmatprep.subr.bf16.mxu0 0
    %2225 = vmatpush2.bf16.msra.mxu0 0
    %2226 = vmatprep.subr.bf16.mxu0 0
    %2227 = vmatpush2.bf16.msra.mxu0 0
    %2228 = vmatprep.mubr.bf16.mxu0 0
    %2229 = vmatmul.mubr.bf16.gmra.mxu0 %v528
    %v2230 = vpop.f32.mrf.mxu0
    %v2231 = vadd.f32 %v2188, %v2230
    %v2232 = vpop.f32.mrf.mxu0
    %v2233 = vadd.f32 %v2190, %v2232
    %v2234 = vpop.f32.mrf.mxu0
    %v2235 = vadd.f32 %v2192, %v2234
    %v2236 = vpop.f32.mrf.mxu0
    %v2237 = vadd.f32 %v2194, %v2236
    %2238 = vdwg.mxu0
    %s2239 = sld [smem:[#allocation2 + $0x1]]
    %v2240 = vstv %s2239
    %v2241 = vmul.f32 %v2240, %v2059
    %v2242 = vmul.f32 %v2240, %v2061
    %v2243 = vmul.f32 %v2240, %v2231
    %v2244 = vmul.f32 %v2240, %v2233
    %v2245 = vmul.f32 %v2240, %v2063
    %v2246 = vmul.f32 %v2240, %v2065
    %v2247 = vmul.f32 %v2240, %v2235
    %v2248 = vmul.f32 %v2240, %v2237
    %v2249 = vmax.f32 %v2059, %v2241
    %v2250 = vmax.f32 %v2061, %v2242
    %v2251 = vmax.f32 %v2231, %v2243
    %v2252 = vmax.f32 %v2233, %v2244
    %v2253 = vmax.f32 %v2063, %v2245
    %v2254 = vmax.f32 %v2065, %v2246
    %v2255 = vmax.f32 %v2235, %v2247
    %v2256 = vmax.f32 %v2237, %v2248
    %v2257 = vpack.c.bf16 %v2253, %v2249
    %v2258 = vpack.c.bf16 %v2254, %v2250
    %v2259 = vpack.c.bf16 %v2255, %v2251
    %v2260 = vpack.c.bf16 %v2256, %v2252
    %v2261 = vld [vmem:[#allocation12] sm:$0xff]
    %v2262 = vld [vmem:[#allocation12 + $0x8] sm:$0xff]
    %v2263 = vld [vmem:[#allocation12 + $0x10] sm:$0xff]
    %v2264 = vld [vmem:[#allocation12 + $0x18] sm:$0xff]
    %v2265 = vld [vmem:[#allocation12 + $0x20] sm:$0xff]
    %v2266 = vld [vmem:[#allocation12 + $0x28] sm:$0xff]
    %v2267 = vld [vmem:[#allocation12 + $0x30] sm:$0xff]
    %v2268 = vld [vmem:[#allocation12 + $0x38] sm:$0xff]
    %v2269 = vld [vmem:[#allocation12 + $0x40] sm:$0xff]
    %v2270 = vld [vmem:[#allocation12 + $0x48] sm:$0xff]
    %v2271 = vld [vmem:[#allocation12 + $0x50] sm:$0xff]
    %v2272 = vld [vmem:[#allocation12 + $0x58] sm:$0xff]
    %v2273 = vld [vmem:[#allocation12 + $0x60] sm:$0xff]
    %v2274 = vld [vmem:[#allocation12 + $0x68] sm:$0xff]
    %v2275 = vld [vmem:[#allocation12 + $0x70] sm:$0xff]
    %v2276 = vld [vmem:[#allocation12 + $0x78] sm:$0xff]
    %v2277 = vld [vmem:[#allocation12 + $0x80] sm:$0xff]
    %v2278 = vld [vmem:[#allocation12 + $0x88] sm:$0xff]
    %v2279 = vld [vmem:[#allocation12 + $0x90] sm:$0xff]
    %v2280 = vld [vmem:[#allocation12 + $0x98] sm:$0xff]
    %v2281 = vld [vmem:[#allocation12 + $0xa0] sm:$0xff]
    %v2282 = vld [vmem:[#allocation12 + $0xa8] sm:$0xff]
    %v2283 = vld [vmem:[#allocation12 + $0xb0] sm:$0xff]
    %v2284 = vld [vmem:[#allocation12 + $0xb8] sm:$0xff]
    %v2285 = vld [vmem:[#allocation12 + $0xc0] sm:$0xff]
    %v2286 = vld [vmem:[#allocation12 + $0xc8] sm:$0xff]
    %v2287 = vld [vmem:[#allocation12 + $0xd0] sm:$0xff]
    %v2288 = vld [vmem:[#allocation12 + $0xd8] sm:$0xff]
    %v2289 = vld [vmem:[#allocation12 + $0xe0] sm:$0xff]
    %v2290 = vld [vmem:[#allocation12 + $0xe8] sm:$0xff]
    %v2291 = vld [vmem:[#allocation12 + $0xf0] sm:$0xff]
    %v2292 = vld [vmem:[#allocation12 + $0xf8] sm:$0xff]
    %v2293 = vld [vmem:[#allocation12 + $0x100] sm:$0xff]
    %v2294 = vld [vmem:[#allocation12 + $0x108] sm:$0xff]
    %v2295 = vld [vmem:[#allocation12 + $0x110] sm:$0xff]
    %v2296 = vld [vmem:[#allocation12 + $0x118] sm:$0xff]
    %v2297 = vld [vmem:[#allocation12 + $0x120] sm:$0xff]
    %v2298 = vld [vmem:[#allocation12 + $0x128] sm:$0xff]
    %v2299 = vld [vmem:[#allocation12 + $0x130] sm:$0xff]
    %v2300 = vld [vmem:[#allocation12 + $0x138] sm:$0xff]
    %v2301 = vld [vmem:[#allocation12 + $0x140] sm:$0xff]
    %v2302 = vld [vmem:[#allocation12 + $0x148] sm:$0xff]
    %v2303 = vld [vmem:[#allocation12 + $0x150] sm:$0xff]
    %v2304 = vld [vmem:[#allocation12 + $0x158] sm:$0xff]
    %v2305 = vld [vmem:[#allocation12 + $0x160] sm:$0xff]
    %v2306 = vld [vmem:[#allocation12 + $0x168] sm:$0xff]
    %v2307 = vld [vmem:[#allocation12 + $0x170] sm:$0xff]
    %v2308 = vld [vmem:[#allocation12 + $0x178] sm:$0xff]
    %v2309 = vld [vmem:[#allocation12 + $0x180] sm:$0xff]
    %v2310 = vld [vmem:[#allocation12 + $0x188] sm:$0xff]
    %v2311 = vld [vmem:[#allocation12 + $0x190] sm:$0xff]
    %v2312 = vld [vmem:[#allocation12 + $0x198] sm:$0xff]
    %v2313 = vld [vmem:[#allocation12 + $0x1a0] sm:$0xff]
    %v2314 = vld [vmem:[#allocation12 + $0x1a8] sm:$0xff]
    %v2315 = vld [vmem:[#allocation12 + $0x1b0] sm:$0xff]
    %v2316 = vld [vmem:[#allocation12 + $0x1b8] sm:$0xff]
    %v2317 = vld [vmem:[#allocation12 + $0x1c0] sm:$0xff]
    %v2318 = vld [vmem:[#allocation12 + $0x1c8] sm:$0xff]
    %v2319 = vld [vmem:[#allocation12 + $0x1d0] sm:$0xff]
    %v2320 = vld [vmem:[#allocation12 + $0x1d8] sm:$0xff]
    %v2321 = vld [vmem:[#allocation12 + $0x1e0] sm:$0xff]
    %v2322 = vld [vmem:[#allocation12 + $0x1e8] sm:$0xff]
    %v2323 = vld [vmem:[#allocation12 + $0x1f0] sm:$0xff]
    %v2324 = vld [vmem:[#allocation12 + $0x1f8] sm:$0xff]
    %v2325 = vld [vmem:[%s7] sm:$0x3]
    %v2327 = vlaneseq
    %v2328 = vshrl.u32 %v2327, 7
    %v2329 = vsub.s32 0, %v2328
    %v2330 = vrot.slane %v2325, %v2329
    %v2331 = vlaneseq
    %v2332 = vshrl.u32 %v2331, 7
    %v2333 = vsub.s32 1, %v2332
    %v2334 = vrot.slane %v2325, %v2333
    %v2401 = vunpack.c.l.b16 %v2261
    %v2402 = vunpack.c.h.b16 %v2261
    %v2403 = vunpack.c.l.b16 %v2262
    %v2404 = vunpack.c.h.b16 %v2262
    %v2405 = vunpack.c.l.b16 %v2263
    %v2406 = vunpack.c.h.b16 %v2263
    %v2407 = vunpack.c.l.b16 %v2264
    %v2408 = vunpack.c.h.b16 %v2264
    %v2409 = vunpack.c.l.b16 %v2265
    %v2410 = vunpack.c.h.b16 %v2265
    %v2411 = vunpack.c.l.b16 %v2266
    %v2412 = vunpack.c.h.b16 %v2266
    %v2413 = vunpack.c.l.b16 %v2267
    %v2414 = vunpack.c.h.b16 %v2267
    %v2415 = vunpack.c.l.b16 %v2268
    %v2416 = vunpack.c.h.b16 %v2268
    %v2417 = vunpack.c.l.b16 %v2269
    %v2418 = vunpack.c.h.b16 %v2269
    %v2419 = vunpack.c.l.b16 %v2270
    %v2420 = vunpack.c.h.b16 %v2270
    %v2421 = vunpack.c.l.b16 %v2271
    %v2422 = vunpack.c.h.b16 %v2271
    %v2423 = vunpack.c.l.b16 %v2272
    %v2424 = vunpack.c.h.b16 %v2272
    %v2425 = vunpack.c.l.b16 %v2273
    %v2426 = vunpack.c.h.b16 %v2273
    %v2427 = vunpack.c.l.b16 %v2274
    %v2428 = vunpack.c.h.b16 %v2274
    %v2429 = vunpack.c.l.b16 %v2275
    %v2430 = vunpack.c.h.b16 %v2275
    %v2431 = vunpack.c.l.b16 %v2276
    %v2432 = vunpack.c.h.b16 %v2276
    %v2433 = vunpack.c.l.b16 %v2277
    %v2434 = vunpack.c.h.b16 %v2277
    %v2435 = vunpack.c.l.b16 %v2278
    %v2436 = vunpack.c.h.b16 %v2278
    %v2437 = vunpack.c.l.b16 %v2279
    %v2438 = vunpack.c.h.b16 %v2279
    %v2439 = vunpack.c.l.b16 %v2280
    %v2440 = vunpack.c.h.b16 %v2280
    %v2441 = vunpack.c.l.b16 %v2281
    %v2442 = vunpack.c.h.b16 %v2281
    %v2443 = vunpack.c.l.b16 %v2282
    %v2444 = vunpack.c.h.b16 %v2282
    %v2445 = vunpack.c.l.b16 %v2283
    %v2446 = vunpack.c.h.b16 %v2283
    %v2447 = vunpack.c.l.b16 %v2284
    %v2448 = vunpack.c.h.b16 %v2284
    %v2449 = vunpack.c.l.b16 %v2285
    %v2450 = vunpack.c.h.b16 %v2285
    %v2451 = vunpack.c.l.b16 %v2286
    %v2452 = vunpack.c.h.b16 %v2286
    %v2453 = vunpack.c.l.b16 %v2287
    %v2454 = vunpack.c.h.b16 %v2287
    %v2455 = vunpack.c.l.b16 %v2288
    %v2456 = vunpack.c.h.b16 %v2288
    %v2457 = vunpack.c.l.b16 %v2289
    %v2458 = vunpack.c.h.b16 %v2289
    %v2459 = vunpack.c.l.b16 %v2290
    %v2460 = vunpack.c.h.b16 %v2290
    %v2461 = vunpack.c.l.b16 %v2291
    %v2462 = vunpack.c.h.b16 %v2291
    %v2463 = vunpack.c.l.b16 %v2292
    %v2464 = vunpack.c.h.b16 %v2292
    %v2465 = vunpack.c.l.b16 %v2293
    %v2466 = vunpack.c.h.b16 %v2293
    %v2467 = vunpack.c.l.b16 %v2294
    %v2468 = vunpack.c.h.b16 %v2294
    %v2469 = vunpack.c.l.b16 %v2295
    %v2470 = vunpack.c.h.b16 %v2295
    %v2471 = vunpack.c.l.b16 %v2296
    %v2472 = vunpack.c.h.b16 %v2296
    %v2473 = vunpack.c.l.b16 %v2297
    %v2474 = vunpack.c.h.b16 %v2297
    %v2475 = vunpack.c.l.b16 %v2298
    %v2476 = vunpack.c.h.b16 %v2298
    %v2477 = vunpack.c.l.b16 %v2299
    %v2478 = vunpack.c.h.b16 %v2299
    %v2479 = vunpack.c.l.b16 %v2300
    %v2480 = vunpack.c.h.b16 %v2300
    %v2481 = vunpack.c.l.b16 %v2301
    %v2482 = vunpack.c.h.b16 %v2301
    %v2483 = vunpack.c.l.b16 %v2302
    %v2484 = vunpack.c.h.b16 %v2302
    %v2485 = vunpack.c.l.b16 %v2303
    %v2486 = vunpack.c.h.b16 %v2303
    %v2487 = vunpack.c.l.b16 %v2304
    %v2488 = vunpack.c.h.b16 %v2304
    %v2489 = vunpack.c.l.b16 %v2305
    %v2490 = vunpack.c.h.b16 %v2305
    %v2491 = vunpack.c.l.b16 %v2306
    %v2492 = vunpack.c.h.b16 %v2306
    %v2493 = vunpack.c.l.b16 %v2307
    %v2494 = vunpack.c.h.b16 %v2307
    %v2495 = vunpack.c.l.b16 %v2308
    %v2496 = vunpack.c.h.b16 %v2308
    %v2497 = vunpack.c.l.b16 %v2309
    %v2498 = vunpack.c.h.b16 %v2309
    %v2499 = vunpack.c.l.b16 %v2310
    %v2500 = vunpack.c.h.b16 %v2310
    %v2501 = vunpack.c.l.b16 %v2311
    %v2502 = vunpack.c.h.b16 %v2311
    %v2503 = vunpack.c.l.b16 %v2312
    %v2504 = vunpack.c.h.b16 %v2312
    %v2505 = vunpack.c.l.b16 %v2313
    %v2506 = vunpack.c.h.b16 %v2313
    %v2507 = vunpack.c.l.b16 %v2314
    %v2508 = vunpack.c.h.b16 %v2314
    %v2509 = vunpack.c.l.b16 %v2315
    %v2510 = vunpack.c.h.b16 %v2315
    %v2511 = vunpack.c.l.b16 %v2316
    %v2512 = vunpack.c.h.b16 %v2316
    %v2513 = vunpack.c.l.b16 %v2317
    %v2514 = vunpack.c.h.b16 %v2317
    %v2515 = vunpack.c.l.b16 %v2318
    %v2516 = vunpack.c.h.b16 %v2318
    %v2517 = vunpack.c.l.b16 %v2319
    %v2518 = vunpack.c.h.b16 %v2319
    %v2519 = vunpack.c.l.b16 %v2320
    %v2520 = vunpack.c.h.b16 %v2320
    %v2521 = vunpack.c.l.b16 %v2321
    %v2522 = vunpack.c.h.b16 %v2321
    %v2523 = vunpack.c.l.b16 %v2322
    %v2524 = vunpack.c.h.b16 %v2322
    %v2525 = vunpack.c.l.b16 %v2323
    %v2526 = vunpack.c.h.b16 %v2323
    %v2527 = vunpack.c.l.b16 %v2324
    %v2528 = vunpack.c.h.b16 %v2324
    %v2529 = vpack.c.b16 %v2403, %v2401
    %v2530 = vpack.c.b16 %v2404, %v2402
    %v2531 = vpack.c.b16 %v2407, %v2405
    %v2532 = vpack.c.b16 %v2408, %v2406
    %v2533 = vpack.c.b16 %v2411, %v2409
    %v2534 = vpack.c.b16 %v2412, %v2410
    %v2535 = vpack.c.b16 %v2415, %v2413
    %v2536 = vpack.c.b16 %v2416, %v2414
    %v2537 = vpack.c.b16 %v2419, %v2417
    %v2538 = vpack.c.b16 %v2420, %v2418
    %v2539 = vpack.c.b16 %v2423, %v2421
    %v2540 = vpack.c.b16 %v2424, %v2422
    %v2541 = vpack.c.b16 %v2427, %v2425
    %v2542 = vpack.c.b16 %v2428, %v2426
    %v2543 = vpack.c.b16 %v2431, %v2429
    %v2544 = vpack.c.b16 %v2432, %v2430
    %v2545 = vpack.c.b16 %v2435, %v2433
    %v2546 = vpack.c.b16 %v2436, %v2434
    %v2547 = vpack.c.b16 %v2439, %v2437
    %v2548 = vpack.c.b16 %v2440, %v2438
    %v2549 = vpack.c.b16 %v2443, %v2441
    %v2550 = vpack.c.b16 %v2444, %v2442
    %v2551 = vpack.c.b16 %v2447, %v2445
    %v2552 = vpack.c.b16 %v2448, %v2446
    %v2553 = vpack.c.b16 %v2451, %v2449
    %v2554 = vpack.c.b16 %v2452, %v2450
    %v2555 = vpack.c.b16 %v2455, %v2453
    %v2556 = vpack.c.b16 %v2456, %v2454
    %v2557 = vpack.c.b16 %v2459, %v2457
    %v2558 = vpack.c.b16 %v2460, %v2458
    %v2559 = vpack.c.b16 %v2463, %v2461
    %v2560 = vpack.c.b16 %v2464, %v2462
    %v2561 = vpack.c.b16 %v2467, %v2465
    %v2562 = vpack.c.b16 %v2468, %v2466
    %v2563 = vpack.c.b16 %v2471, %v2469
    %v2564 = vpack.c.b16 %v2472, %v2470
    %v2565 = vpack.c.b16 %v2475, %v2473
    %v2566 = vpack.c.b16 %v2476, %v2474
    %v2567 = vpack.c.b16 %v2479, %v2477
    %v2568 = vpack.c.b16 %v2480, %v2478
    %v2569 = vpack.c.b16 %v2483, %v2481
    %v2570 = vpack.c.b16 %v2484, %v2482
    %v2571 = vpack.c.b16 %v2487, %v2485
    %v2572 = vpack.c.b16 %v2488, %v2486
    %v2573 = vpack.c.b16 %v2491, %v2489
    %v2574 = vpack.c.b16 %v2492, %v2490
    %v2575 = vpack.c.b16 %v2495, %v2493
    %v2576 = vpack.c.b16 %v2496, %v2494
    %v2577 = vpack.c.b16 %v2499, %v2497
    %v2578 = vpack.c.b16 %v2500, %v2498
    %v2579 = vpack.c.b16 %v2503, %v2501
    %v2580 = vpack.c.b16 %v2504, %v2502
    %v2581 = vpack.c.b16 %v2507, %v2505
    %v2582 = vpack.c.b16 %v2508, %v2506
    %v2583 = vpack.c.b16 %v2511, %v2509
    %v2584 = vpack.c.b16 %v2512, %v2510
    %v2585 = vpack.c.b16 %v2515, %v2513
    %v2586 = vpack.c.b16 %v2516, %v2514
    %v2587 = vpack.c.b16 %v2519, %v2517
    %v2588 = vpack.c.b16 %v2520, %v2518
    %v2589 = vpack.c.b16 %v2523, %v2521
    %v2590 = vpack.c.b16 %v2524, %v2522
    %v2591 = vpack.c.b16 %v2527, %v2525
    %v2592 = vpack.c.b16 %v2528, %v2526
    %2657 = vmatprep.subr.bf16.mxu0 %v2544
    %2658 = vmatpush1.bf16.msra.mxu0 %v2543
    %2659 = vmatprep.subr.bf16.mxu0 %v2542
    %2660 = vmatpush1.bf16.msra.mxu0 %v2541
    %2661 = vmatprep.subr.bf16.mxu0 %v2540
    %2662 = vmatpush1.bf16.msra.mxu0 %v2539
    %2663 = vmatprep.subr.bf16.mxu0 %v2538
    %2664 = vmatpush1.bf16.msra.mxu0 %v2537
    %2665 = vmatprep.subr.bf16.mxu0 %v2536
    %2666 = vmatpush1.bf16.msra.mxu0 %v2535
    %2667 = vmatprep.subr.bf16.mxu0 %v2534
    %2668 = vmatpush1.bf16.msra.mxu0 %v2533
    %2669 = vmatprep.subr.bf16.mxu0 %v2532
    %2670 = vmatpush1.bf16.msra.mxu0 %v2531
    %2671 = vmatprep.subr.bf16.mxu0 %v2530
    %2672 = vmatpush1.bf16.msra.mxu0 %v2529
    %2673 = vmatprep.subr.bf16.mxu0 %v2560
    %2674 = vmatpush2.bf16.msra.mxu0 %v2559
    %2675 = vmatprep.subr.bf16.mxu0 %v2558
    %2676 = vmatpush2.bf16.msra.mxu0 %v2557
    %2677 = vmatprep.subr.bf16.mxu0 %v2556
    %2678 = vmatpush2.bf16.msra.mxu0 %v2555
    %2679 = vmatprep.subr.bf16.mxu0 %v2554
    %2680 = vmatpush2.bf16.msra.mxu0 %v2553
    %2681 = vmatprep.subr.bf16.mxu0 %v2552
    %2682 = vmatpush2.bf16.msra.mxu0 %v2551
    %2683 = vmatprep.subr.bf16.mxu0 %v2550
    %2684 = vmatpush2.bf16.msra.mxu0 %v2549
    %2685 = vmatprep.subr.bf16.mxu0 %v2548
    %2686 = vmatpush2.bf16.msra.mxu0 %v2547
    %2687 = vmatprep.subr.bf16.mxu0 %v2546
    %2688 = vmatpush2.bf16.msra.mxu0 %v2545
    %2689 = vmatprep.mubr.bf16.mxu0 %v2258
    %2690 = vmatmul.mubr.bf16.gmra.mxu0 %v2257
    %v2691 = vpop.f32.mrf.mxu0
    %v2692 = vadd.f32 %v2330, %v2691
    %v2693 = vpop.f32.mrf.mxu0
    %v2694 = vadd.f32 %v2334, %v2693
    %v2695 = vpop.f32.mrf.mxu0
    %v2696 = vadd.f32 %v2330, %v2695
    %v2697 = vpop.f32.mrf.mxu0
    %v2698 = vadd.f32 %v2334, %v2697
    %2699 = vdwg.mxu0
    %2700 = vmatprep.subr.bf16.mxu0 %v2576
    %2701 = vmatpush1.bf16.msra.mxu0 %v2575
    %2702 = vmatprep.subr.bf16.mxu0 %v2574
    %2703 = vmatpush1.bf16.msra.mxu0 %v2573
    %2704 = vmatprep.subr.bf16.mxu0 %v2572
    %2705 = vmatpush1.bf16.msra.mxu0 %v2571
    %2706 = vmatprep.subr.bf16.mxu0 %v2570
    %2707 = vmatpush1.bf16.msra.mxu0 %v2569
    %2708 = vmatprep.subr.bf16.mxu0 %v2568
    %2709 = vmatpush1.bf16.msra.mxu0 %v2567
    %2710 = vmatprep.subr.bf16.mxu0 %v2566
    %2711 = vmatpush1.bf16.msra.mxu0 %v2565
    %2712 = vmatprep.subr.bf16.mxu0 %v2564
    %2713 = vmatpush1.bf16.msra.mxu0 %v2563
    %2714 = vmatprep.subr.bf16.mxu0 %v2562
    %2715 = vmatpush1.bf16.msra.mxu0 %v2561
    %2716 = vmatprep.subr.bf16.mxu0 %v2592
    %2717 = vmatpush2.bf16.msra.mxu0 %v2591
    %2718 = vmatprep.subr.bf16.mxu0 %v2590
    %2719 = vmatpush2.bf16.msra.mxu0 %v2589
    %2720 = vmatprep.subr.bf16.mxu0 %v2588
    %2721 = vmatpush2.bf16.msra.mxu0 %v2587
    %2722 = vmatprep.subr.bf16.mxu0 %v2586
    %2723 = vmatpush2.bf16.msra.mxu0 %v2585
    %2724 = vmatprep.subr.bf16.mxu0 %v2584
    %2725 = vmatpush2.bf16.msra.mxu0 %v2583
    %2726 = vmatprep.subr.bf16.mxu0 %v2582
    %2727 = vmatpush2.bf16.msra.mxu0 %v2581
    %2728 = vmatprep.subr.bf16.mxu0 %v2580
    %2729 = vmatpush2.bf16.msra.mxu0 %v2579
    %2730 = vmatprep.subr.bf16.mxu0 %v2578
    %2731 = vmatpush2.bf16.msra.mxu0 %v2577
    %2732 = vmatprep.mubr.bf16.mxu0 %v2260
    %2733 = vmatmul.mubr.bf16.gmra.mxu0 %v2259
    %v2734 = vpop.f32.mrf.mxu0
    %v2735 = vadd.f32 %v2692, %v2734
    %v2736 = vpop.f32.mrf.mxu0
    %v2737 = vadd.f32 %v2694, %v2736
    %v2738 = vpop.f32.mrf.mxu0
    %v2739 = vadd.f32 %v2696, %v2738
    %v2740 = vpop.f32.mrf.mxu0
    %v2741 = vadd.f32 %v2698, %v2740
    %2742 = vdwg.mxu0
    %s2743 = sld [smem:[#allocation2 + $0x2]]
    %v2744 = vstv %s2743
    %v2745 = vmul.f32 %v2744, %v2735
    %v2746 = vmul.f32 %v2744, %v2737
    %v2747 = vmul.f32 %v2744, %v2739
    %v2748 = vmul.f32 %v2744, %v2741
    %v2749 = vmax.f32 %v2735, %v2745
    %v2750 = vmax.f32 %v2737, %v2746
    %v2751 = vmax.f32 %v2739, %v2747
    %v2752 = vmax.f32 %v2741, %v2748
    %v2753 = vpack.c.bf16 %v2751, %v2749
    %v2754 = vpack.c.bf16 %v2752, %v2750
    %v2755 = vld [vmem:[#allocation13] sm:$0xf]
    %v2756 = vld [vmem:[#allocation13 + $0x4] sm:$0xf]
    %v2757 = vld [vmem:[#allocation13 + $0x8] sm:$0xf]
    %v2758 = vld [vmem:[#allocation13 + $0xc] sm:$0xf]
    %v2759 = vld [vmem:[#allocation13 + $0x10] sm:$0xf]
    %v2760 = vld [vmem:[#allocation13 + $0x14] sm:$0xf]
    %v2761 = vld [vmem:[#allocation13 + $0x18] sm:$0xf]
    %v2762 = vld [vmem:[#allocation13 + $0x1c] sm:$0xf]
    %v2763 = vld [vmem:[#allocation13 + $0x20] sm:$0xf]
    %v2764 = vld [vmem:[#allocation13 + $0x24] sm:$0xf]
    %v2765 = vld [vmem:[#allocation13 + $0x28] sm:$0xf]
    %v2766 = vld [vmem:[#allocation13 + $0x2c] sm:$0xf]
    %v2767 = vld [vmem:[#allocation13 + $0x30] sm:$0xf]
    %v2768 = vld [vmem:[#allocation13 + $0x34] sm:$0xf]
    %v2769 = vld [vmem:[#allocation13 + $0x38] sm:$0xf]
    %v2770 = vld [vmem:[#allocation13 + $0x3c] sm:$0xf]
    %v2771 = vld [vmem:[#allocation13 + $0x40] sm:$0xf]
    %v2772 = vld [vmem:[#allocation13 + $0x44] sm:$0xf]
    %v2773 = vld [vmem:[#allocation13 + $0x48] sm:$0xf]
    %v2774 = vld [vmem:[#allocation13 + $0x4c] sm:$0xf]
    %v2775 = vld [vmem:[#allocation13 + $0x50] sm:$0xf]
    %v2776 = vld [vmem:[#allocation13 + $0x54] sm:$0xf]
    %v2777 = vld [vmem:[#allocation13 + $0x58] sm:$0xf]
    %v2778 = vld [vmem:[#allocation13 + $0x5c] sm:$0xf]
    %v2779 = vld [vmem:[#allocation13 + $0x60] sm:$0xf]
    %v2780 = vld [vmem:[#allocation13 + $0x64] sm:$0xf]
    %v2781 = vld [vmem:[#allocation13 + $0x68] sm:$0xf]
    %v2782 = vld [vmem:[#allocation13 + $0x6c] sm:$0xf]
    %v2783 = vld [vmem:[#allocation13 + $0x70] sm:$0xf]
    %v2784 = vld [vmem:[#allocation13 + $0x74] sm:$0xf]
    %v2785 = vld [vmem:[#allocation13 + $0x78] sm:$0xf]
    %v2786 = vld [vmem:[#allocation13 + $0x7c] sm:$0xf]
    %v2787 = vld [vmem:[%s9] sm:$0x1]
    %v2789 = vlaneseq
    %v2790 = vshrl.u32 %v2789, 7
    %v2791 = vsub.s32 0, %v2790
    %v2792 = vrot.slane %v2787, %v2791
    %v2826 = vunpack.c.l.b16 %v2755
    %v2827 = vunpack.c.l.b16 %v2756
    %v2828 = vunpack.c.l.b16 %v2757
    %v2829 = vunpack.c.l.b16 %v2758
    %v2830 = vunpack.c.l.b16 %v2759
    %v2831 = vunpack.c.l.b16 %v2760
    %v2832 = vunpack.c.l.b16 %v2761
    %v2833 = vunpack.c.l.b16 %v2762
    %v2834 = vunpack.c.l.b16 %v2763
    %v2835 = vunpack.c.l.b16 %v2764
    %v2836 = vunpack.c.l.b16 %v2765
    %v2837 = vunpack.c.l.b16 %v2766
    %v2838 = vunpack.c.l.b16 %v2767
    %v2839 = vunpack.c.l.b16 %v2768
    %v2840 = vunpack.c.l.b16 %v2769
    %v2841 = vunpack.c.l.b16 %v2770
    %v2842 = vunpack.c.l.b16 %v2771
    %v2843 = vunpack.c.l.b16 %v2772
    %v2844 = vunpack.c.l.b16 %v2773
    %v2845 = vunpack.c.l.b16 %v2774
    %v2846 = vunpack.c.l.b16 %v2775
    %v2847 = vunpack.c.l.b16 %v2776
    %v2848 = vunpack.c.l.b16 %v2777
    %v2849 = vunpack.c.l.b16 %v2778
    %v2850 = vunpack.c.l.b16 %v2779
    %v2851 = vunpack.c.l.b16 %v2780
    %v2852 = vunpack.c.l.b16 %v2781
    %v2853 = vunpack.c.l.b16 %v2782
    %v2854 = vunpack.c.l.b16 %v2783
    %v2855 = vunpack.c.l.b16 %v2784
    %v2856 = vunpack.c.l.b16 %v2785
    %v2857 = vunpack.c.l.b16 %v2786
    %v2858 = vpack.c.b16 %v2827, %v2826
    %v2859 = vpack.c.b16 %v2829, %v2828
    %v2860 = vpack.c.b16 %v2831, %v2830
    %v2861 = vpack.c.b16 %v2833, %v2832
    %v2862 = vpack.c.b16 %v2835, %v2834
    %v2863 = vpack.c.b16 %v2837, %v2836
    %v2864 = vpack.c.b16 %v2839, %v2838
    %v2865 = vpack.c.b16 %v2841, %v2840
    %v2866 = vpack.c.b16 %v2843, %v2842
    %v2867 = vpack.c.b16 %v2845, %v2844
    %v2868 = vpack.c.b16 %v2847, %v2846
    %v2869 = vpack.c.b16 %v2849, %v2848
    %v2870 = vpack.c.b16 %v2851, %v2850
    %v2871 = vpack.c.b16 %v2853, %v2852
    %v2872 = vpack.c.b16 %v2855, %v2854
    %v2873 = vpack.c.b16 %v2857, %v2856
    %2890 = vmatprep.subr.bf16.mxu0 0
    %2891 = vmatpush1.bf16.msra.mxu0 %v2865
    %2892 = vmatprep.subr.bf16.mxu0 0
    %2893 = vmatpush1.bf16.msra.mxu0 %v2864
    %2894 = vmatprep.subr.bf16.mxu0 0
    %2895 = vmatpush1.bf16.msra.mxu0 %v2863
    %2896 = vmatprep.subr.bf16.mxu0 0
    %2897 = vmatpush1.bf16.msra.mxu0 %v2862
    %2898 = vmatprep.subr.bf16.mxu0 0
    %2899 = vmatpush1.bf16.msra.mxu0 %v2861
    %2900 = vmatprep.subr.bf16.mxu0 0
    %2901 = vmatpush1.bf16.msra.mxu0 %v2860
    %2902 = vmatprep.subr.bf16.mxu0 0
    %2903 = vmatpush1.bf16.msra.mxu0 %v2859
    %2904 = vmatprep.subr.bf16.mxu0 0
    %2905 = vmatpush1.bf16.msra.mxu0 %v2858
    %2906 = vmatprep.subr.bf16.mxu0 0
    %2907 = vmatpush2.bf16.msra.mxu0 %v2873
    %2908 = vmatprep.subr.bf16.mxu0 0
    %2909 = vmatpush2.bf16.msra.mxu0 %v2872
    %2910 = vmatprep.subr.bf16.mxu0 0
    %2911 = vmatpush2.bf16.msra.mxu0 %v2871
    %2912 = vmatprep.subr.bf16.mxu0 0
    %2913 = vmatpush2.bf16.msra.mxu0 %v2870
    %2914 = vmatprep.subr.bf16.mxu0 0
    %2915 = vmatpush2.bf16.msra.mxu0 %v2869
    %2916 = vmatprep.subr.bf16.mxu0 0
    %2917 = vmatpush2.bf16.msra.mxu0 %v2868
    %2918 = vmatprep.subr.bf16.mxu0 0
    %2919 = vmatpush2.bf16.msra.mxu0 %v2867
    %2920 = vmatprep.subr.bf16.mxu0 0
    %2921 = vmatpush2.bf16.msra.mxu0 %v2866
    %2922 = vmatprep.mubr.bf16.mxu0 %v2754
    %2923 = vmatmul.mubr.bf16.gmra.mxu0 %v2753
    %v2924 = vpop.f32.mrf.mxu0
    %v2925 = vadd.f32 %v2792, %v2924
    %v2926 = vpop.f32.mrf.mxu0
    %v2927 = vpop.f32.mrf.mxu0
    %v2928 = vadd.f32 %v2792, %v2927
    %v2929 = vpop.f32.mrf.mxu0
    %2930 = vdwg.mxu0
    %s2931 = sld [smem:[#allocation2 + $0x3]]
    %v2932 = vstv %s2931
    %v2933 = vmul.f32 %v2932, %v2925
    %v2934 = vmul.f32 %v2932, %v2928
    %v2935 = vmax.f32 %v2925, %v2933
    %v2936 = vmax.f32 %v2928, %v2934
    %v2937 = vpack.c.bf16 %v2936, %v2935
    %v2938 = vld [vmem:[#allocation15] sm:$0xf]
    %v2939 = vld [vmem:[#allocation15 + $0x4] sm:$0xf]
    %v2940 = vld [vmem:[#allocation15 + $0x8] sm:$0xf]
    %v2941 = vld [vmem:[#allocation15 + $0xc] sm:$0xf]
    %v2942 = vld [vmem:[#allocation15 + $0x10] sm:$0xf]
    %v2943 = vld [vmem:[#allocation15 + $0x14] sm:$0xf]
    %v2944 = vld [vmem:[#allocation15 + $0x18] sm:$0xf]
    %v2945 = vld [vmem:[#allocation15 + $0x1c] sm:$0xf]
    %v2946 = vld [vmem:[#allocation15 + $0x20] sm:$0xf]
    %v2947 = vld [vmem:[#allocation15 + $0x24] sm:$0xf]
    %v2948 = vld [vmem:[#allocation15 + $0x28] sm:$0xf]
    %v2949 = vld [vmem:[#allocation15 + $0x2c] sm:$0xf]
    %v2950 = vld [vmem:[#allocation15 + $0x30] sm:$0xf]
    %v2951 = vld [vmem:[#allocation15 + $0x34] sm:$0xf]
    %v2952 = vld [vmem:[#allocation15 + $0x38] sm:$0xf]
    %v2953 = vld [vmem:[#allocation15 + $0x3c] sm:$0xf]
    %v2954 = vld [vmem:[%s11] sm:$0x1]
    %v2956 = vlaneseq
    %v2957 = vshrl.u32 %v2956, 7
    %v2958 = vsub.s32 0, %v2957
    %v2959 = vrot.slane %v2954, %v2958
    %v2977 = vunpack.c.l.b16 %v2938
    %v2978 = vunpack.c.l.b16 %v2939
    %v2979 = vunpack.c.l.b16 %v2940
    %v2980 = vunpack.c.l.b16 %v2941
    %v2981 = vunpack.c.l.b16 %v2942
    %v2982 = vunpack.c.l.b16 %v2943
    %v2983 = vunpack.c.l.b16 %v2944
    %v2984 = vunpack.c.l.b16 %v2945
    %v2985 = vunpack.c.l.b16 %v2946
    %v2986 = vunpack.c.l.b16 %v2947
    %v2987 = vunpack.c.l.b16 %v2948
    %v2988 = vunpack.c.l.b16 %v2949
    %v2989 = vunpack.c.l.b16 %v2950
    %v2990 = vunpack.c.l.b16 %v2951
    %v2991 = vunpack.c.l.b16 %v2952
    %v2992 = vunpack.c.l.b16 %v2953
    %v2993 = vpack.c.b16 %v2978, %v2977
    %v2994 = vpack.c.b16 %v2980, %v2979
    %v2995 = vpack.c.b16 %v2982, %v2981
    %v2996 = vpack.c.b16 %v2984, %v2983
    %v2997 = vpack.c.b16 %v2986, %v2985
    %v2998 = vpack.c.b16 %v2988, %v2987
    %v2999 = vpack.c.b16 %v2990, %v2989
    %v3000 = vpack.c.b16 %v2992, %v2991
    %3009 = vmatprep.subr.bf16.mxu0 0
    %3010 = vmatpush1.bf16.msra.mxu0 %v3000
    %3011 = vmatprep.subr.bf16.mxu0 0
    %3012 = vmatpush1.bf16.msra.mxu0 %v2999
    %3013 = vmatprep.subr.bf16.mxu0 0
    %3014 = vmatpush1.bf16.msra.mxu0 %v2998
    %3015 = vmatprep.subr.bf16.mxu0 0
    %3016 = vmatpush1.bf16.msra.mxu0 %v2997
    %3017 = vmatprep.subr.bf16.mxu0 0
    %3018 = vmatpush1.bf16.msra.mxu0 %v2996
    %3019 = vmatprep.subr.bf16.mxu0 0
    %3020 = vmatpush1.bf16.msra.mxu0 %v2995
    %3021 = vmatprep.subr.bf16.mxu0 0
    %3022 = vmatpush1.bf16.msra.mxu0 %v2994
    %3023 = vmatprep.subr.bf16.mxu0 0
    %3024 = vmatpush1.bf16.msra.mxu0 %v2993
    %3025 = vmatprep.subr.bf16.mxu0 0
    %3026 = vmatpush2.bf16.msra.mxu0 0
    %3027 = vmatprep.subr.bf16.mxu0 0
    %3028 = vmatpush2.bf16.msra.mxu0 0
    %3029 = vmatprep.subr.bf16.mxu0 0
    %3030 = vmatpush2.bf16.msra.mxu0 0
    %3031 = vmatprep.subr.bf16.mxu0 0
    %3032 = vmatpush2.bf16.msra.mxu0 0
    %3033 = vmatprep.subr.bf16.mxu0 0
    %3034 = vmatpush2.bf16.msra.mxu0 0
    %3035 = vmatprep.subr.bf16.mxu0 0
    %3036 = vmatpush2.bf16.msra.mxu0 0
    %3037 = vmatprep.subr.bf16.mxu0 0
    %3038 = vmatpush2.bf16.msra.mxu0 0
    %3039 = vmatprep.subr.bf16.mxu0 0
    %3040 = vmatpush2.bf16.msra.mxu0 0
    %3041 = vmatprep.mubr.bf16.mxu0 0
    %3042 = vmatmul.mubr.bf16.gmra.mxu0 %v2937
    %v3043 = vpop.f32.mrf.mxu0
    %v3044 = vadd.f32 %v2959, %v3043
    %v3045 = vpop.f32.mrf.mxu0
    %v3046 = vpop.f32.mrf.mxu0
    %v3047 = vadd.f32 %v2959, %v3046
    %v3048 = vpop.f32.mrf.mxu0
    %3049 = vdwg.mxu0
    %s3050 = sld [smem:[#allocation2 + $0x4]]
    %v3051 = vstv %s3050
    %v3052 = vmul.f32 %v3051, %v3044
    %v3053 = vmul.f32 %v3051, %v3047
    %v3054 = vmax.f32 %v3044, %v3052
    %v3055 = vmax.f32 %v3047, %v3053
    %v3056 = vpack.c.bf16 %v3055, %v3054
    %v3057 = vld [vmem:[#allocation16] sm:$0xf]
    %v3058 = vld [vmem:[#allocation16 + $0x4] sm:$0xf]
    %v3059 = vld [vmem:[#allocation16 + $0x8] sm:$0xf]
    %v3060 = vld [vmem:[#allocation16 + $0xc] sm:$0xf]
    %v3061 = vld [vmem:[#allocation16 + $0x10] sm:$0xf]
    %v3062 = vld [vmem:[#allocation16 + $0x14] sm:$0xf]
    %v3063 = vld [vmem:[#allocation16 + $0x18] sm:$0xf]
    %v3064 = vld [vmem:[#allocation16 + $0x1c] sm:$0xf]
    %v3065 = vld [vmem:[#allocation16 + $0x20] sm:$0xf]
    %v3066 = vld [vmem:[#allocation16 + $0x24] sm:$0xf]
    %v3067 = vld [vmem:[#allocation16 + $0x28] sm:$0xf]
    %v3068 = vld [vmem:[#allocation16 + $0x2c] sm:$0xf]
    %v3069 = vld [vmem:[#allocation16 + $0x30] sm:$0xf]
    %v3070 = vld [vmem:[#allocation16 + $0x34] sm:$0xf]
    %v3071 = vld [vmem:[#allocation16 + $0x38] sm:$0xf]
    %v3072 = vld [vmem:[#allocation16 + $0x3c] sm:$0xf]
    %v3073 = vld [vmem:[%s13] sm:$0x1]
    %v3075 = vlaneseq
    %v3076 = vshrl.u32 %v3075, 7
    %v3077 = vsub.s32 0, %v3076
    %v3078 = vrot.slane %v3073, %v3077
    %v3096 = vunpack.c.l.b16 %v3057
    %v3097 = vunpack.c.l.b16 %v3058
    %v3098 = vunpack.c.l.b16 %v3059
    %v3099 = vunpack.c.l.b16 %v3060
    %v3100 = vunpack.c.l.b16 %v3061
    %v3101 = vunpack.c.l.b16 %v3062
    %v3102 = vunpack.c.l.b16 %v3063
    %v3103 = vunpack.c.l.b16 %v3064
    %v3104 = vunpack.c.l.b16 %v3065
    %v3105 = vunpack.c.l.b16 %v3066
    %v3106 = vunpack.c.l.b16 %v3067
    %v3107 = vunpack.c.l.b16 %v3068
    %v3108 = vunpack.c.l.b16 %v3069
    %v3109 = vunpack.c.l.b16 %v3070
    %v3110 = vunpack.c.l.b16 %v3071
    %v3111 = vunpack.c.l.b16 %v3072
    %v3112 = vpack.c.b16 %v3097, %v3096
    %v3113 = vpack.c.b16 %v3099, %v3098
    %v3114 = vpack.c.b16 %v3101, %v3100
    %v3115 = vpack.c.b16 %v3103, %v3102
    %v3116 = vpack.c.b16 %v3105, %v3104
    %v3117 = vpack.c.b16 %v3107, %v3106
    %v3118 = vpack.c.b16 %v3109, %v3108
    %v3119 = vpack.c.b16 %v3111, %v3110
    %3128 = vmatprep.subr.bf16.mxu0 0
    %3129 = vmatpush1.bf16.msra.mxu0 %v3119
    %3130 = vmatprep.subr.bf16.mxu0 0
    %3131 = vmatpush1.bf16.msra.mxu0 %v3118
    %3132 = vmatprep.subr.bf16.mxu0 0
    %3133 = vmatpush1.bf16.msra.mxu0 %v3117
    %3134 = vmatprep.subr.bf16.mxu0 0
    %3135 = vmatpush1.bf16.msra.mxu0 %v3116
    %3136 = vmatprep.subr.bf16.mxu0 0
    %3137 = vmatpush1.bf16.msra.mxu0 %v3115
    %3138 = vmatprep.subr.bf16.mxu0 0
    %3139 = vmatpush1.bf16.msra.mxu0 %v3114
    %3140 = vmatprep.subr.bf16.mxu0 0
    %3141 = vmatpush1.bf16.msra.mxu0 %v3113
    %3142 = vmatprep.subr.bf16.mxu0 0
    %3143 = vmatpush1.bf16.msra.mxu0 %v3112
    %3144 = vmatprep.subr.bf16.mxu0 0
    %3145 = vmatpush2.bf16.msra.mxu0 0
    %3146 = vmatprep.subr.bf16.mxu0 0
    %3147 = vmatpush2.bf16.msra.mxu0 0
    %3148 = vmatprep.subr.bf16.mxu0 0
    %3149 = vmatpush2.bf16.msra.mxu0 0
    %3150 = vmatprep.subr.bf16.mxu0 0
    %3151 = vmatpush2.bf16.msra.mxu0 0
    %3152 = vmatprep.subr.bf16.mxu0 0
    %3153 = vmatpush2.bf16.msra.mxu0 0
    %3154 = vmatprep.subr.bf16.mxu0 0
    %3155 = vmatpush2.bf16.msra.mxu0 0
    %3156 = vmatprep.subr.bf16.mxu0 0
    %3157 = vmatpush2.bf16.msra.mxu0 0
    %3158 = vmatprep.subr.bf16.mxu0 0
    %3159 = vmatpush2.bf16.msra.mxu0 0
    %3160 = vmatprep.mubr.bf16.mxu0 0
    %3161 = vmatmul.mubr.bf16.gmra.mxu0 %v3056
    %v3162 = vpop.f32.mrf.mxu0
    %v3163 = vadd.f32 %v3078, %v3162
    %v3164 = vpop.f32.mrf.mxu0
    %v3165 = vpop.f32.mrf.mxu0
    %v3166 = vadd.f32 %v3078, %v3165
    %v3167 = vpop.f32.mrf.mxu0
    %3168 = vdwg.mxu0
    %s3169 = sld [smem:[#allocation2 + $0x5]]
    %v3170 = vstv %s3169
    %v3171 = vmul.f32 %v3170, %v3163
    %v3172 = vmul.f32 %v3170, %v3166
    %v3173 = vmax.f32 %v3163, %v3171
    %v3174 = vmax.f32 %v3166, %v3172
    %v3175 = vpack.c.bf16 %v3174, %v3173
    %v3176 = vld [vmem:[#allocation18] sm:$0xf]
    %v3177 = vld [vmem:[#allocation18 + $0x4] sm:$0xf]
    %v3178 = vld [vmem:[#allocation18 + $0x8] sm:$0xf]
    %v3179 = vld [vmem:[#allocation18 + $0xc] sm:$0xf]
    %v3180 = vld [vmem:[#allocation18 + $0x10] sm:$0xf]
    %v3181 = vld [vmem:[#allocation18 + $0x14] sm:$0xf]
    %v3182 = vld [vmem:[#allocation18 + $0x18] sm:$0xf]
    %v3183 = vld [vmem:[#allocation18 + $0x1c] sm:$0xf]
    %v3184 = vld [vmem:[#allocation18 + $0x20] sm:$0xf]
    %v3185 = vld [vmem:[#allocation18 + $0x24] sm:$0xf]
    %v3186 = vld [vmem:[#allocation18 + $0x28] sm:$0xf]
    %v3187 = vld [vmem:[#allocation18 + $0x2c] sm:$0xf]
    %v3188 = vld [vmem:[#allocation18 + $0x30] sm:$0xf]
    %v3189 = vld [vmem:[#allocation18 + $0x34] sm:$0xf]
    %v3190 = vld [vmem:[#allocation18 + $0x38] sm:$0xf]
    %v3191 = vld [vmem:[#allocation18 + $0x3c] sm:$0xf]
    %v3192 = vld [vmem:[%s15] sm:$0x1]
    %v3194 = vlaneseq
    %v3195 = vshrl.u32 %v3194, 7
    %v3196 = vsub.s32 0, %v3195
    %v3197 = vrot.slane %v3192, %v3196
    %v3215 = vunpack.c.l.b16 %v3176
    %v3216 = vunpack.c.l.b16 %v3177
    %v3217 = vunpack.c.l.b16 %v3178
    %v3218 = vunpack.c.l.b16 %v3179
    %v3219 = vunpack.c.l.b16 %v3180
    %v3220 = vunpack.c.l.b16 %v3181
    %v3221 = vunpack.c.l.b16 %v3182
    %v3222 = vunpack.c.l.b16 %v3183
    %v3223 = vunpack.c.l.b16 %v3184
    %v3224 = vunpack.c.l.b16 %v3185
    %v3225 = vunpack.c.l.b16 %v3186
    %v3226 = vunpack.c.l.b16 %v3187
    %v3227 = vunpack.c.l.b16 %v3188
    %v3228 = vunpack.c.l.b16 %v3189
    %v3229 = vunpack.c.l.b16 %v3190
    %v3230 = vunpack.c.l.b16 %v3191
    %v3231 = vpack.c.b16 %v3216, %v3215
    %v3232 = vpack.c.b16 %v3218, %v3217
    %v3233 = vpack.c.b16 %v3220, %v3219
    %v3234 = vpack.c.b16 %v3222, %v3221
    %v3235 = vpack.c.b16 %v3224, %v3223
    %v3236 = vpack.c.b16 %v3226, %v3225
    %v3237 = vpack.c.b16 %v3228, %v3227
    %v3238 = vpack.c.b16 %v3230, %v3229
    %3247 = vmatprep.subr.bf16.mxu0 0
    %3248 = vmatpush1.bf16.msra.mxu0 %v3238
    %3249 = vmatprep.subr.bf16.mxu0 0
    %3250 = vmatpush1.bf16.msra.mxu0 %v3237
    %3251 = vmatprep.subr.bf16.mxu0 0
    %3252 = vmatpush1.bf16.msra.mxu0 %v3236
    %3253 = vmatprep.subr.bf16.mxu0 0
    %3254 = vmatpush1.bf16.msra.mxu0 %v3235
    %3255 = vmatprep.subr.bf16.mxu0 0
    %3256 = vmatpush1.bf16.msra.mxu0 %v3234
    %3257 = vmatprep.subr.bf16.mxu0 0
    %3258 = vmatpush1.bf16.msra.mxu0 %v3233
    %3259 = vmatprep.subr.bf16.mxu0 0
    %3260 = vmatpush1.bf16.msra.mxu0 %v3232
    %3261 = vmatprep.subr.bf16.mxu0 0
    %3262 = vmatpush1.bf16.msra.mxu0 %v3231
    %3263 = vmatprep.subr.bf16.mxu0 0
    %3264 = vmatpush2.bf16.msra.mxu0 0
    %3265 = vmatprep.subr.bf16.mxu0 0
    %3266 = vmatpush2.bf16.msra.mxu0 0
    %3267 = vmatprep.subr.bf16.mxu0 0
    %3268 = vmatpush2.bf16.msra.mxu0 0
    %3269 = vmatprep.subr.bf16.mxu0 0
    %3270 = vmatpush2.bf16.msra.mxu0 0
    %3271 = vmatprep.subr.bf16.mxu0 0
    %3272 = vmatpush2.bf16.msra.mxu0 0
    %3273 = vmatprep.subr.bf16.mxu0 0
    %3274 = vmatpush2.bf16.msra.mxu0 0
    %3275 = vmatprep.subr.bf16.mxu0 0
    %3276 = vmatpush2.bf16.msra.mxu0 0
    %3277 = vmatprep.subr.bf16.mxu0 0
    %3278 = vmatpush2.bf16.msra.mxu0 0
    %3279 = vmatprep.mubr.bf16.mxu0 0
    %3280 = vmatmul.mubr.bf16.gmra.mxu0 %v3175
    %v3281 = vpop.f32.mrf.mxu0
    %v3282 = vadd.f32 %v3197, %v3281
    %v3283 = vpop.f32.mrf.mxu0
    %v3284 = vpop.f32.mrf.mxu0
    %v3285 = vadd.f32 %v3197, %v3284
    %v3286 = vpop.f32.mrf.mxu0
    %3287 = vdwg.mxu0
    %3288 = vst [vmem:[#allocation19] sm:$0xff] %v3282
    %3289 = vst [vmem:[#allocation19 + $0x8] sm:$0xff] %v3285
    // Predicated region
    $region106: #{tpu_custom_call.1} parent=1 // pred_check
      _
    $region107: #{tpu_custom_call.1} parent=1 // pred_check_branch
      %3291 = sbr.rel (0) target = $region109
    $region108: #{tpu_custom_call.1} parent=1 // pred_region
      %s3293 = ssub.s32 256, 256
      %3294 = vsyncadd [#allocation4], %s3293
      %s3295 = sshll.u32 [#allocation19], 4
      %s3296 = int_to_ptr.vmem [resolvable:$true] %s3295
      %3301 = dma.vmem_to_hbm [thread:$0]  %s3296, 256, %s16, [#allocation4], 128, 128, 8
    $region109: #{tpu_custom_call.1} parent=1 // pred_fallthru
      _
    // Predicated region
    $region110: #{tpu_custom_call.1} parent=1 // pred_check
      _
    $region111: #{tpu_custom_call.1} parent=1 // pred_check_branch
      %3303 = sbr.rel (0) target = $region113
    $region112: #{tpu_custom_call.1} parent=1 // pred_region
      %3304 = dma.done [#allocation4], 256
    $region113: #{tpu_custom_call.1} parent=1 // pred_fallthru
      _
    %3305 = vsyncpa [#allocation3], 1
    %3306 = vsyncpa [#allocation8], 1
    %3307 = vsyncpa [#allocation11], 1
    %3308 = vsyncpa [#allocation14], 1
    %3309 = vsyncpa [#allocation17], 1
    %3310 = vsyncpa [#allocation4], 1
    %3311 = vsyncpa [#allocation5], 1

</llo_original>
